<compile_context>
chip_gen: v6e
topology: v6e:2x2x1
jax: 0.10.0
libtpu: 0.0.40
codegen_flags: <defaults>
</compile_context>

<pallas_src>
import functools

import jax
import jax.numpy as jnp
from jax import lax
from jax.experimental import pallas as pl
from jax.experimental.pallas import tpu as pltpu

# Small, BERT-like-but-tiny sizes for the synthetic run.
N = 3     # number of entries in `data` (list length)
S = 8     # per-entry batch (LSTM sequence length)
H = 32    # hidden size
HP = 128  # hidden size padded to a full lane tile (per-gate)
L = 5     # num_labels


def _lstm_ce_kernel(x_ref,                 # (S*NP, H)   CLS embeddings, time-major, padded
                    w_ih_ref,              # (H, 4*HP)   input weights, gate-column padded
                    w_hh_ref,              # (HP, 4*HP)  recurrent weights, padded
                    b_ref,                 # (1, 4*HP)   b_ih + b_hh, gate-column padded
                    w_proj_ref,            # (HP, L)     projection weight (transposed, padded)
                    b_proj_ref,            # (1, L)
                    labels_ref,            # (NP, 1)     int32 labels, -1 for padding rows
                    loss_ref,              # (1, 1)      scalar loss (SMEM output)
                    *, n_real, n_pad, seq_len, hp, num_labels):
    # Hoist the input projection out of the recurrence: one batched MXU call
    # (S*NP, H) x (H, 4*HP) instead of S*N tiny 1-row matmuls.
    gates_x = (jnp.dot(x_ref[...], w_ih_ref[...],
                       preferred_element_type=jnp.float32)
               + b_ref[...])                                    # (S*NP, 4*HP)

    w_hh = w_hh_ref[...]                                        # (HP, 4*HP)
    h = jnp.zeros((n_pad, hp), jnp.float32)
    c = jnp.zeros((n_pad, hp), jnp.float32)

    # Fully unrolled recurrence (S is small and static); only h @ W_hh remains
    # on the serial chain.  PyTorch gate order: i, f, g, o.  Each gate slice is
    # a full (8,128) vreg thanks to the HP=128 lane padding.
    # TODO(synk): Mosaic is expected to keep w_hh staged in the MXU weight regs
    # across the 8 steps; drive explicitly with matmul_push_rhs/acc_lhs/pop if
    # a bundle dump shows redundant weight pushes.
    for t in range(seq_len):
        gx = gates_x[t * n_pad:(t + 1) * n_pad, :]              # (NP, 4*HP), tile-aligned
        gates = gx + jnp.dot(h, w_hh, preferred_element_type=jnp.float32)
        i_g = jax.nn.sigmoid(gates[:, 0:hp])
        f_g = jax.nn.sigmoid(gates[:, hp:2 * hp])
        g_g = jnp.tanh(gates[:, 2 * hp:3 * hp])
        o_g = jax.nn.sigmoid(gates[:, 3 * hp:4 * hp])
        c = f_g * c + i_g * g_g
        h = o_g * jnp.tanh(c)
        # Padded lanes: zero weights/biases => gates=0 => i=f=o=0.5, g=0
        # => c_pad stays 0, h_pad stays 0.  Numerics identical to H=32.

    # Projection head on the last hidden state of every sample.
    logits = (jnp.dot(h, w_proj_ref[...], preferred_element_type=jnp.float32)
              + b_proj_ref[...])                                # (NP, L)

    # One-hot / validity mask built in-kernel: padded rows carry label == -1,
    # which never matches the iota, so their one-hot row is all zero and the
    # row drops out of the loss.
    labels = labels_ref[...]                                    # (NP, 1) int32
    col = lax.broadcasted_iota(jnp.int32, (n_pad, num_labels), 1)
    onehot = (col == labels).astype(jnp.float32)                # (NP, L)
    valid = jnp.sum(onehot, axis=-1, keepdims=True)             # (NP, 1) in {0, 1}

    m = jnp.max(logits, axis=-1, keepdims=True)                 # (NP, 1)
    lse = m + jnp.log(jnp.sum(jnp.exp(logits - m), axis=-1, keepdims=True))
    picked = jnp.sum(logits * onehot, axis=-1, keepdims=True)   # (NP, 1)

    # Mean CE over the N real samples; single scalar store to SMEM.
    loss_ref[0, 0] = jnp.sum(valid * lse - picked) / n_real


def prepare_params(w_ih, w_hh, b_ih, b_hh, w_proj, b_proj, hp=HP):
    """One-time parameter layout prep (hoisted out of the per-call path)."""
    h = w_ih.shape[1]
    l = w_proj.shape[0]

    def pad_gate_cols(mat):
        # mat: (rows, 4*h) with gate-ordered column blocks [i|f|g|o] of width h.
        # Pad each gate block to hp columns (zeros) -> (rows, 4*hp).
        parts = [mat[:, k * h:(k + 1) * h] for k in range(4)]
        return jnp.concatenate(
            [jnp.pad(p, ((0, 0), (0, hp - h))) for p in parts], axis=1)

    w_ih_p = pad_gate_cols(jnp.asarray(w_ih, jnp.float32).T)            # (H, 4*HP)
    w_hh_p = pad_gate_cols(
        jnp.pad(jnp.asarray(w_hh, jnp.float32).T, ((0, hp - h), (0, 0))))  # (HP, 4*HP)
    b_p = pad_gate_cols(
        jnp.asarray(b_ih + b_hh, jnp.float32).reshape(1, 4 * h))        # (1, 4*HP)
    w_proj_p = jnp.pad(jnp.asarray(w_proj, jnp.float32).T,
                       ((0, hp - h), (0, 0)))                           # (HP, L)
    b_proj_p = jnp.asarray(b_proj, jnp.float32).reshape(1, l)           # (1, L)
    return w_ih_p, w_hh_p, b_p, w_proj_p, b_proj_p


@jax.jit
def model_loss(labels, x, w_ih_p, w_hh_p, b_p, w_proj_p, b_proj_p):
    n, s, h = x.shape
    hp = w_hh_p.shape[0]
    l = w_proj_p.shape[1]
    n_pad = max(8, ((n + 7) // 8) * 8)   # pad sample dim to a full sublane tile

    # Per-call glue (fused by jit): time-major layout + sample padding for x,
    # -1-padded int32 labels.
    x_t = jnp.transpose(x, (1, 0, 2)).astype(jnp.float32)       # (S, N, H)
    x_t = jnp.pad(x_t, ((0, 0), (0, n_pad - n), (0, 0)))        # (S, NP, H)
    x_flat = x_t.reshape(s * n_pad, h)                          # (S*NP, H)

    labels_p = jnp.pad(labels.astype(jnp.int32), (0, n_pad - n),
                       constant_values=-1).reshape(n_pad, 1)    # (NP, 1)

    kernel = functools.partial(_lstm_ce_kernel, n_real=n, n_pad=n_pad,
                               seq_len=s, hp=hp, num_labels=l)

    loss = pl.pallas_call(
        kernel,
        out_shape=jax.ShapeDtypeStruct((1, 1), jnp.float32),
        in_specs=[pl.BlockSpec(memory_space=pltpu.MemorySpace.VMEM)] * 7,
        out_specs=pl.BlockSpec(memory_space=pltpu.MemorySpace.SMEM),
    )(x_flat, w_ih_p, w_hh_p, b_p, w_proj_p, b_proj_p, labels_p)
    return loss[0, 0]


def reference_loss(labels, x, w_ih, w_hh, b_ih, b_hh, w_proj, b_proj):
    """Pure-JAX reference matching PyTorch LSTM + Linear + CrossEntropyLoss."""
    def encode(seq):
        def step(carry, xt):
            hh, cc = carry
            gates = xt @ w_ih.T + hh @ w_hh.T + b_ih + b_hh
            i = jax.nn.sigmoid(gates[0:H])
            f = jax.nn.sigmoid(gates[H:2 * H])
            g = jnp.tanh(gates[2 * H:3 * H])
            o = jax.nn.sigmoid(gates[3 * H:4 * H])
            cc = f * cc + i * g
            hh = o * jnp.tanh(cc)
            return (hh, cc), None
        (hh, _), _ = lax.scan(step, (jnp.zeros(H), jnp.zeros(H)), seq)
        return hh @ w_proj.T + b_proj
    logits = jax.vmap(encode)(x)
    lse = jax.scipy.special.logsumexp(logits, axis=-1)
    picked = jnp.take_along_axis(logits, labels[:, None], axis=-1)[:, 0]
    return jnp.mean(lse - picked)


if __name__ == "__main__":
    key = jax.random.PRNGKey(0)
    kx, kl, k1, k2, k3, k4, k5, k6 = jax.random.split(key, 8)

    # Stand-in for BERT CLS embeddings: one [S, H] block per data-dict.
    x = jax.random.normal(kx, (N, S, H), jnp.float32)
    labels = jax.random.randint(kl, (N,), 0, L, jnp.int32)

    # Deterministic parameter init (PyTorch LSTM/Linear-style uniform(-1/sqrt(H), 1/sqrt(H))).
    bound = 1.0 / jnp.sqrt(jnp.float32(H))
    w_ih = jax.random.uniform(k1, (4 * H, H), jnp.float32, -bound, bound)
    w_hh = jax.random.uniform(k2, (4 * H, H), jnp.float32, -bound, bound)
    b_ih = jax.random.uniform(k3, (4 * H,), jnp.float32, -bound, bound)
    b_hh = jax.random.uniform(k4, (4 * H,), jnp.float32, -bound, bound)
    w_proj = jax.random.uniform(k5, (L, H), jnp.float32, -bound, bound)
    b_proj = jax.random.uniform(k6, (L,), jnp.float32, -bound, bound)

    # One-time parameter layout prep (hoisted out of the call path).
    params = prepare_params(w_ih, w_hh, b_ih, b_hh, w_proj, b_proj)

    loss = model_loss(labels, x, *params)
    jax.block_until_ready(loss)

    ref = reference_loss(labels, x, w_ih, w_hh, b_ih, b_hh, w_proj, b_proj)
    assert jnp.allclose(loss, ref, rtol=1e-4, atol=1e-4), (loss, ref)

    print("KERNEL_OK")
</pallas_src>

<mosaic_0001>
module attributes {stable_mosaic.version = 11 : i64} {
  func.func @_lstm_ce_kernel(%arg0: memref<64x32xf32, #tpu.memory_space<vmem>>, %arg1: memref<32x512xf32, #tpu.memory_space<vmem>>, %arg2: memref<128x512xf32, #tpu.memory_space<vmem>>, %arg3: memref<1x512xf32, #tpu.memory_space<vmem>>, %arg4: memref<128x5xf32, #tpu.memory_space<vmem>>, %arg5: memref<1x5xf32, #tpu.memory_space<vmem>>, %arg6: memref<8x1xi32, #tpu.memory_space<vmem>>, %arg7: memref<1x1xf32, #tpu.memory_space<smem>>) attributes {dimension_semantics = [], scalar_prefetch = 0 : i64, scratch_operands = 0 : i64, tpu.core_type = #tpu.core_type<tc>} {
    %c0 = arith.constant 0 : index
    %c0_0 = arith.constant 0 : index
    %0 = vector.load %arg0[%c0, %c0_0] : memref<64x32xf32, #tpu.memory_space<vmem>>, vector<64x32xf32>
    %c0_1 = arith.constant 0 : index
    %c0_2 = arith.constant 0 : index
    %1 = vector.load %arg1[%c0_1, %c0_2] : memref<32x512xf32, #tpu.memory_space<vmem>>, vector<32x512xf32>
    %cst = arith.constant dense<0.000000e+00> : vector<64x512xf32>
    %2 = tpu.matmul %0, %1, %cst {dimension_numbers = #tpu.dot_dimension_numbers<[1], [0], [0], [1], [0, 0, 1, 1], [], []>} : vector<64x32xf32>, vector<32x512xf32>, vector<64x512xf32> -> vector<64x512xf32>
    %c0_3 = arith.constant 0 : index
    %c0_4 = arith.constant 0 : index
    %3 = vector.load %arg3[%c0_3, %c0_4] : memref<1x512xf32, #tpu.memory_space<vmem>>, vector<1x512xf32>
    %4 = vector.broadcast %3 : vector<1x512xf32> to vector<64x512xf32>
    %5 = arith.addf %2, %4 : vector<64x512xf32>
    %c0_5 = arith.constant 0 : index
    %c0_6 = arith.constant 0 : index
    %6 = vector.load %arg2[%c0_5, %c0_6] : memref<128x512xf32, #tpu.memory_space<vmem>>, vector<128x512xf32>
    %cst_7 = arith.constant 0.000000e+00 : f32
    %7 = vector.broadcast %cst_7 : f32 to vector<8x128xf32>
    %cst_8 = arith.constant 0.000000e+00 : f32
    %8 = vector.broadcast %cst_8 : f32 to vector<8x128xf32>
    %9 = vector.extract_strided_slice %5 {offsets = [0, 0], sizes = [8, 512], strides = [1, 1]} : vector<64x512xf32> to vector<8x512xf32>
    %cst_9 = arith.constant dense<0.000000e+00> : vector<8x512xf32>
    %10 = tpu.matmul %7, %6, %cst_9 {dimension_numbers = #tpu.dot_dimension_numbers<[1], [0], [0], [1], [0, 0, 1, 1], [], []>} : vector<8x128xf32>, vector<128x512xf32>, vector<8x512xf32> -> vector<8x512xf32>
    %11 = arith.addf %9, %10 : vector<8x512xf32>
    %12 = vector.extract_strided_slice %11 {offsets = [0, 0], sizes = [8, 128], strides = [1, 1]} : vector<8x512xf32> to vector<8x128xf32>
    %13 = arith.negf %12 : vector<8x128xf32>
    %14 = math.exp %13 : vector<8x128xf32>
    %cst_10 = arith.constant 1.000000e+00 : f32
    %15 = vector.broadcast %cst_10 : f32 to vector<8x128xf32>
    %16 = arith.addf %15, %14 : vector<8x128xf32>
    %17 = arith.divf %15, %16 : vector<8x128xf32>
    %18 = vector.extract_strided_slice %11 {offsets = [0, 128], sizes = [8, 128], strides = [1, 1]} : vector<8x512xf32> to vector<8x128xf32>
    %19 = arith.negf %18 : vector<8x128xf32>
    %20 = math.exp %19 : vector<8x128xf32>
    %cst_11 = arith.constant 1.000000e+00 : f32
    %21 = vector.broadcast %cst_11 : f32 to vector<8x128xf32>
    %22 = arith.addf %21, %20 : vector<8x128xf32>
    %23 = arith.divf %21, %22 : vector<8x128xf32>
    %24 = vector.extract_strided_slice %11 {offsets = [0, 256], sizes = [8, 128], strides = [1, 1]} : vector<8x512xf32> to vector<8x128xf32>
    %25 = math.tanh %24 : vector<8x128xf32>
    %26 = vector.extract_strided_slice %11 {offsets = [0, 384], sizes = [8, 128], strides = [1, 1]} : vector<8x512xf32> to vector<8x128xf32>
    %27 = arith.negf %26 : vector<8x128xf32>
    %28 = math.exp %27 : vector<8x128xf32>
    %cst_12 = arith.constant 1.000000e+00 : f32
    %29 = vector.broadcast %cst_12 : f32 to vector<8x128xf32>
    %30 = arith.addf %29, %28 : vector<8x128xf32>
    %31 = arith.divf %29, %30 : vector<8x128xf32>
    %32 = arith.mulf %23, %8 : vector<8x128xf32>
    %33 = arith.mulf %17, %25 : vector<8x128xf32>
    %34 = arith.addf %32, %33 : vector<8x128xf32>
    %35 = math.tanh %34 : vector<8x128xf32>
    %36 = arith.mulf %31, %35 : vector<8x128xf32>
    %37 = vector.extract_strided_slice %5 {offsets = [8, 0], sizes = [8, 512], strides = [1, 1]} : vector<64x512xf32> to vector<8x512xf32>
    %cst_13 = arith.constant dense<0.000000e+00> : vector<8x512xf32>
    %38 = tpu.matmul %36, %6, %cst_13 {dimension_numbers = #tpu.dot_dimension_numbers<[1], [0], [0], [1], [0, 0, 1, 1], [], []>} : vector<8x128xf32>, vector<128x512xf32>, vector<8x512xf32> -> vector<8x512xf32>
    %39 = arith.addf %37, %38 : vector<8x512xf32>
    %40 = vector.extract_strided_slice %39 {offsets = [0, 0], sizes = [8, 128], strides = [1, 1]} : vector<8x512xf32> to vector<8x128xf32>
    %41 = arith.negf %40 : vector<8x128xf32>
    %42 = math.exp %41 : vector<8x128xf32>
    %cst_14 = arith.constant 1.000000e+00 : f32
    %43 = vector.broadcast %cst_14 : f32 to vector<8x128xf32>
    %44 = arith.addf %43, %42 : vector<8x128xf32>
    %45 = arith.divf %43, %44 : vector<8x128xf32>
    %46 = vector.extract_strided_slice %39 {offsets = [0, 128], sizes = [8, 128], strides = [1, 1]} : vector<8x512xf32> to vector<8x128xf32>
    %47 = arith.negf %46 : vector<8x128xf32>
    %48 = math.exp %47 : vector<8x128xf32>
    %cst_15 = arith.constant 1.000000e+00 : f32
    %49 = vector.broadcast %cst_15 : f32 to vector<8x128xf32>
    %50 = arith.addf %49, %48 : vector<8x128xf32>
    %51 = arith.divf %49, %50 : vector<8x128xf32>
    %52 = vector.extract_strided_slice %39 {offsets = [0, 256], sizes = [8, 128], strides = [1, 1]} : vector<8x512xf32> to vector<8x128xf32>
    %53 = math.tanh %52 : vector<8x128xf32>
    %54 = vector.extract_strided_slice %39 {offsets = [0, 384], sizes = [8, 128], strides = [1, 1]} : vector<8x512xf32> to vector<8x128xf32>
    %55 = arith.negf %54 : vector<8x128xf32>
    %56 = math.exp %55 : vector<8x128xf32>
    %cst_16 = arith.constant 1.000000e+00 : f32
    %57 = vector.broadcast %cst_16 : f32 to vector<8x128xf32>
    %58 = arith.addf %57, %56 : vector<8x128xf32>
    %59 = arith.divf %57, %58 : vector<8x128xf32>
    %60 = arith.mulf %51, %34 : vector<8x128xf32>
    %61 = arith.mulf %45, %53 : vector<8x128xf32>
    %62 = arith.addf %60, %61 : vector<8x128xf32>
    %63 = math.tanh %62 : vector<8x128xf32>
    %64 = arith.mulf %59, %63 : vector<8x128xf32>
    %65 = vector.extract_strided_slice %5 {offsets = [16, 0], sizes = [8, 512], strides = [1, 1]} : vector<64x512xf32> to vector<8x512xf32>
    %cst_17 = arith.constant dense<0.000000e+00> : vector<8x512xf32>
    %66 = tpu.matmul %64, %6, %cst_17 {dimension_numbers = #tpu.dot_dimension_numbers<[1], [0], [0], [1], [0, 0, 1, 1], [], []>} : vector<8x128xf32>, vector<128x512xf32>, vector<8x512xf32> -> vector<8x512xf32>
    %67 = arith.addf %65, %66 : vector<8x512xf32>
    %68 = vector.extract_strided_slice %67 {offsets = [0, 0], sizes = [8, 128], strides = [1, 1]} : vector<8x512xf32> to vector<8x128xf32>
    %69 = arith.negf %68 : vector<8x128xf32>
    %70 = math.exp %69 : vector<8x128xf32>
    %cst_18 = arith.constant 1.000000e+00 : f32
    %71 = vector.broadcast %cst_18 : f32 to vector<8x128xf32>
    %72 = arith.addf %71, %70 : vector<8x128xf32>
    %73 = arith.divf %71, %72 : vector<8x128xf32>
    %74 = vector.extract_strided_slice %67 {offsets = [0, 128], sizes = [8, 128], strides = [1, 1]} : vector<8x512xf32> to vector<8x128xf32>
    %75 = arith.negf %74 : vector<8x128xf32>
    %76 = math.exp %75 : vector<8x128xf32>
    %cst_19 = arith.constant 1.000000e+00 : f32
    %77 = vector.broadcast %cst_19 : f32 to vector<8x128xf32>
    %78 = arith.addf %77, %76 : vector<8x128xf32>
    %79 = arith.divf %77, %78 : vector<8x128xf32>
    %80 = vector.extract_strided_slice %67 {offsets = [0, 256], sizes = [8, 128], strides = [1, 1]} : vector<8x512xf32> to vector<8x128xf32>
    %81 = math.tanh %80 : vector<8x128xf32>
    %82 = vector.extract_strided_slice %67 {offsets = [0, 384], sizes = [8, 128], strides = [1, 1]} : vector<8x512xf32> to vector<8x128xf32>
    %83 = arith.negf %82 : vector<8x128xf32>
    %84 = math.exp %83 : vector<8x128xf32>
    %cst_20 = arith.constant 1.000000e+00 : f32
    %85 = vector.broadcast %cst_20 : f32 to vector<8x128xf32>
    %86 = arith.addf %85, %84 : vector<8x128xf32>
    %87 = arith.divf %85, %86 : vector<8x128xf32>
    %88 = arith.mulf %79, %62 : vector<8x128xf32>
    %89 = arith.mulf %73, %81 : vector<8x128xf32>
    %90 = arith.addf %88, %89 : vector<8x128xf32>
    %91 = math.tanh %90 : vector<8x128xf32>
    %92 = arith.mulf %87, %91 : vector<8x128xf32>
    %93 = vector.extract_strided_slice %5 {offsets = [24, 0], sizes = [8, 512], strides = [1, 1]} : vector<64x512xf32> to vector<8x512xf32>
    %cst_21 = arith.constant dense<0.000000e+00> : vector<8x512xf32>
    %94 = tpu.matmul %92, %6, %cst_21 {dimension_numbers = #tpu.dot_dimension_numbers<[1], [0], [0], [1], [0, 0, 1, 1], [], []>} : vector<8x128xf32>, vector<128x512xf32>, vector<8x512xf32> -> vector<8x512xf32>
    %95 = arith.addf %93, %94 : vector<8x512xf32>
    %96 = vector.extract_strided_slice %95 {offsets = [0, 0], sizes = [8, 128], strides = [1, 1]} : vector<8x512xf32> to vector<8x128xf32>
    %97 = arith.negf %96 : vector<8x128xf32>
    %98 = math.exp %97 : vector<8x128xf32>
    %cst_22 = arith.constant 1.000000e+00 : f32
    %99 = vector.broadcast %cst_22 : f32 to vector<8x128xf32>
    %100 = arith.addf %99, %98 : vector<8x128xf32>
    %101 = arith.divf %99, %100 : vector<8x128xf32>
    %102 = vector.extract_strided_slice %95 {offsets = [0, 128], sizes = [8, 128], strides = [1, 1]} : vector<8x512xf32> to vector<8x128xf32>
    %103 = arith.negf %102 : vector<8x128xf32>
    %104 = math.exp %103 : vector<8x128xf32>
    %cst_23 = arith.constant 1.000000e+00 : f32
    %105 = vector.broadcast %cst_23 : f32 to vector<8x128xf32>
    %106 = arith.addf %105, %104 : vector<8x128xf32>
    %107 = arith.divf %105, %106 : vector<8x128xf32>
    %108 = vector.extract_strided_slice %95 {offsets = [0, 256], sizes = [8, 128], strides = [1, 1]} : vector<8x512xf32> to vector<8x128xf32>
    %109 = math.tanh %108 : vector<8x128xf32>
    %110 = vector.extract_strided_slice %95 {offsets = [0, 384], sizes = [8, 128], strides = [1, 1]} : vector<8x512xf32> to vector<8x128xf32>
    %111 = arith.negf %110 : vector<8x128xf32>
    %112 = math.exp %111 : vector<8x128xf32>
    %cst_24 = arith.constant 1.000000e+00 : f32
    %113 = vector.broadcast %cst_24 : f32 to vector<8x128xf32>
    %114 = arith.addf %113, %112 : vector<8x128xf32>
    %115 = arith.divf %113, %114 : vector<8x128xf32>
    %116 = arith.mulf %107, %90 : vector<8x128xf32>
    %117 = arith.mulf %101, %109 : vector<8x128xf32>
    %118 = arith.addf %116, %117 : vector<8x128xf32>
    %119 = math.tanh %118 : vector<8x128xf32>
    %120 = arith.mulf %115, %119 : vector<8x128xf32>
    %121 = vector.extract_strided_slice %5 {offsets = [32, 0], sizes = [8, 512], strides = [1, 1]} : vector<64x512xf32> to vector<8x512xf32>
    %cst_25 = arith.constant dense<0.000000e+00> : vector<8x512xf32>
    %122 = tpu.matmul %120, %6, %cst_25 {dimension_numbers = #tpu.dot_dimension_numbers<[1], [0], [0], [1], [0, 0, 1, 1], [], []>} : vector<8x128xf32>, vector<128x512xf32>, vector<8x512xf32> -> vector<8x512xf32>
    %123 = arith.addf %121, %122 : vector<8x512xf32>
    %124 = vector.extract_strided_slice %123 {offsets = [0, 0], sizes = [8, 128], strides = [1, 1]} : vector<8x512xf32> to vector<8x128xf32>
    %125 = arith.negf %124 : vector<8x128xf32>
    %126 = math.exp %125 : vector<8x128xf32>
    %cst_26 = arith.constant 1.000000e+00 : f32
    %127 = vector.broadcast %cst_26 : f32 to vector<8x128xf32>
    %128 = arith.addf %127, %126 : vector<8x128xf32>
    %129 = arith.divf %127, %128 : vector<8x128xf32>
    %130 = vector.extract_strided_slice %123 {offsets = [0, 128], sizes = [8, 128], strides = [1, 1]} : vector<8x512xf32> to vector<8x128xf32>
    %131 = arith.negf %130 : vector<8x128xf32>
    %132 = math.exp %131 : vector<8x128xf32>
    %cst_27 = arith.constant 1.000000e+00 : f32
    %133 = vector.broadcast %cst_27 : f32 to vector<8x128xf32>
    %134 = arith.addf %133, %132 : vector<8x128xf32>
    %135 = arith.divf %133, %134 : vector<8x128xf32>
    %136 = vector.extract_strided_slice %123 {offsets = [0, 256], sizes = [8, 128], strides = [1, 1]} : vector<8x512xf32> to vector<8x128xf32>
    %137 = math.tanh %136 : vector<8x128xf32>
    %138 = vector.extract_strided_slice %123 {offsets = [0, 384], sizes = [8, 128], strides = [1, 1]} : vector<8x512xf32> to vector<8x128xf32>
    %139 = arith.negf %138 : vector<8x128xf32>
    %140 = math.exp %139 : vector<8x128xf32>
    %cst_28 = arith.constant 1.000000e+00 : f32
    %141 = vector.broadcast %cst_28 : f32 to vector<8x128xf32>
    %142 = arith.addf %141, %140 : vector<8x128xf32>
    %143 = arith.divf %141, %142 : vector<8x128xf32>
    %144 = arith.mulf %135, %118 : vector<8x128xf32>
    %145 = arith.mulf %129, %137 : vector<8x128xf32>
    %146 = arith.addf %144, %145 : vector<8x128xf32>
    %147 = math.tanh %146 : vector<8x128xf32>
    %148 = arith.mulf %143, %147 : vector<8x128xf32>
    %149 = vector.extract_strided_slice %5 {offsets = [40, 0], sizes = [8, 512], strides = [1, 1]} : vector<64x512xf32> to vector<8x512xf32>
    %cst_29 = arith.constant dense<0.000000e+00> : vector<8x512xf32>
    %150 = tpu.matmul %148, %6, %cst_29 {dimension_numbers = #tpu.dot_dimension_numbers<[1], [0], [0], [1], [0, 0, 1, 1], [], []>} : vector<8x128xf32>, vector<128x512xf32>, vector<8x512xf32> -> vector<8x512xf32>
    %151 = arith.addf %149, %150 : vector<8x512xf32>
    %152 = vector.extract_strided_slice %151 {offsets = [0, 0], sizes = [8, 128], strides = [1, 1]} : vector<8x512xf32> to vector<8x128xf32>
    %153 = arith.negf %152 : vector<8x128xf32>
    %154 = math.exp %153 : vector<8x128xf32>
    %cst_30 = arith.constant 1.000000e+00 : f32
    %155 = vector.broadcast %cst_30 : f32 to vector<8x128xf32>
    %156 = arith.addf %155, %154 : vector<8x128xf32>
    %157 = arith.divf %155, %156 : vector<8x128xf32>
    %158 = vector.extract_strided_slice %151 {offsets = [0, 128], sizes = [8, 128], strides = [1, 1]} : vector<8x512xf32> to vector<8x128xf32>
    %159 = arith.negf %158 : vector<8x128xf32>
    %160 = math.exp %159 : vector<8x128xf32>
    %cst_31 = arith.constant 1.000000e+00 : f32
    %161 = vector.broadcast %cst_31 : f32 to vector<8x128xf32>
    %162 = arith.addf %161, %160 : vector<8x128xf32>
    %163 = arith.divf %161, %162 : vector<8x128xf32>
    %164 = vector.extract_strided_slice %151 {offsets = [0, 256], sizes = [8, 128], strides = [1, 1]} : vector<8x512xf32> to vector<8x128xf32>
    %165 = math.tanh %164 : vector<8x128xf32>
    %166 = vector.extract_strided_slice %151 {offsets = [0, 384], sizes = [8, 128], strides = [1, 1]} : vector<8x512xf32> to vector<8x128xf32>
    %167 = arith.negf %166 : vector<8x128xf32>
    %168 = math.exp %167 : vector<8x128xf32>
    %cst_32 = arith.constant 1.000000e+00 : f32
    %169 = vector.broadcast %cst_32 : f32 to vector<8x128xf32>
    %170 = arith.addf %169, %168 : vector<8x128xf32>
    %171 = arith.divf %169, %170 : vector<8x128xf32>
    %172 = arith.mulf %163, %146 : vector<8x128xf32>
    %173 = arith.mulf %157, %165 : vector<8x128xf32>
    %174 = arith.addf %172, %173 : vector<8x128xf32>
    %175 = math.tanh %174 : vector<8x128xf32>
    %176 = arith.mulf %171, %175 : vector<8x128xf32>
    %177 = vector.extract_strided_slice %5 {offsets = [48, 0], sizes = [8, 512], strides = [1, 1]} : vector<64x512xf32> to vector<8x512xf32>
    %cst_33 = arith.constant dense<0.000000e+00> : vector<8x512xf32>
    %178 = tpu.matmul %176, %6, %cst_33 {dimension_numbers = #tpu.dot_dimension_numbers<[1], [0], [0], [1], [0, 0, 1, 1], [], []>} : vector<8x128xf32>, vector<128x512xf32>, vector<8x512xf32> -> vector<8x512xf32>
    %179 = arith.addf %177, %178 : vector<8x512xf32>
    %180 = vector.extract_strided_slice %179 {offsets = [0, 0], sizes = [8, 128], strides = [1, 1]} : vector<8x512xf32> to vector<8x128xf32>
    %181 = arith.negf %180 : vector<8x128xf32>
    %182 = math.exp %181 : vector<8x128xf32>
    %cst_34 = arith.constant 1.000000e+00 : f32
    %183 = vector.broadcast %cst_34 : f32 to vector<8x128xf32>
    %184 = arith.addf %183, %182 : vector<8x128xf32>
    %185 = arith.divf %183, %184 : vector<8x128xf32>
    %186 = vector.extract_strided_slice %179 {offsets = [0, 128], sizes = [8, 128], strides = [1, 1]} : vector<8x512xf32> to vector<8x128xf32>
    %187 = arith.negf %186 : vector<8x128xf32>
    %188 = math.exp %187 : vector<8x128xf32>
    %cst_35 = arith.constant 1.000000e+00 : f32
    %189 = vector.broadcast %cst_35 : f32 to vector<8x128xf32>
    %190 = arith.addf %189, %188 : vector<8x128xf32>
    %191 = arith.divf %189, %190 : vector<8x128xf32>
    %192 = vector.extract_strided_slice %179 {offsets = [0, 256], sizes = [8, 128], strides = [1, 1]} : vector<8x512xf32> to vector<8x128xf32>
    %193 = math.tanh %192 : vector<8x128xf32>
    %194 = vector.extract_strided_slice %179 {offsets = [0, 384], sizes = [8, 128], strides = [1, 1]} : vector<8x512xf32> to vector<8x128xf32>
    %195 = arith.negf %194 : vector<8x128xf32>
    %196 = math.exp %195 : vector<8x128xf32>
    %cst_36 = arith.constant 1.000000e+00 : f32
    %197 = vector.broadcast %cst_36 : f32 to vector<8x128xf32>
    %198 = arith.addf %197, %196 : vector<8x128xf32>
    %199 = arith.divf %197, %198 : vector<8x128xf32>
    %200 = arith.mulf %191, %174 : vector<8x128xf32>
    %201 = arith.mulf %185, %193 : vector<8x128xf32>
    %202 = arith.addf %200, %201 : vector<8x128xf32>
    %203 = math.tanh %202 : vector<8x128xf32>
    %204 = arith.mulf %199, %203 : vector<8x128xf32>
    %205 = vector.extract_strided_slice %5 {offsets = [56, 0], sizes = [8, 512], strides = [1, 1]} : vector<64x512xf32> to vector<8x512xf32>
    %cst_37 = arith.constant dense<0.000000e+00> : vector<8x512xf32>
    %206 = tpu.matmul %204, %6, %cst_37 {dimension_numbers = #tpu.dot_dimension_numbers<[1], [0], [0], [1], [0, 0, 1, 1], [], []>} : vector<8x128xf32>, vector<128x512xf32>, vector<8x512xf32> -> vector<8x512xf32>
    %207 = arith.addf %205, %206 : vector<8x512xf32>
    %208 = vector.extract_strided_slice %207 {offsets = [0, 0], sizes = [8, 128], strides = [1, 1]} : vector<8x512xf32> to vector<8x128xf32>
    %209 = arith.negf %208 : vector<8x128xf32>
    %210 = math.exp %209 : vector<8x128xf32>
    %cst_38 = arith.constant 1.000000e+00 : f32
    %211 = vector.broadcast %cst_38 : f32 to vector<8x128xf32>
    %212 = arith.addf %211, %210 : vector<8x128xf32>
    %213 = arith.divf %211, %212 : vector<8x128xf32>
    %214 = vector.extract_strided_slice %207 {offsets = [0, 128], sizes = [8, 128], strides = [1, 1]} : vector<8x512xf32> to vector<8x128xf32>
    %215 = arith.negf %214 : vector<8x128xf32>
    %216 = math.exp %215 : vector<8x128xf32>
    %cst_39 = arith.constant 1.000000e+00 : f32
    %217 = vector.broadcast %cst_39 : f32 to vector<8x128xf32>
    %218 = arith.addf %217, %216 : vector<8x128xf32>
    %219 = arith.divf %217, %218 : vector<8x128xf32>
    %220 = vector.extract_strided_slice %207 {offsets = [0, 256], sizes = [8, 128], strides = [1, 1]} : vector<8x512xf32> to vector<8x128xf32>
    %221 = math.tanh %220 : vector<8x128xf32>
    %222 = vector.extract_strided_slice %207 {offsets = [0, 384], sizes = [8, 128], strides = [1, 1]} : vector<8x512xf32> to vector<8x128xf32>
    %223 = arith.negf %222 : vector<8x128xf32>
    %224 = math.exp %223 : vector<8x128xf32>
    %cst_40 = arith.constant 1.000000e+00 : f32
    %225 = vector.broadcast %cst_40 : f32 to vector<8x128xf32>
    %226 = arith.addf %225, %224 : vector<8x128xf32>
    %227 = arith.divf %225, %226 : vector<8x128xf32>
    %228 = arith.mulf %219, %202 : vector<8x128xf32>
    %229 = arith.mulf %213, %221 : vector<8x128xf32>
    %230 = arith.addf %228, %229 : vector<8x128xf32>
    %231 = math.tanh %230 : vector<8x128xf32>
    %232 = arith.mulf %227, %231 : vector<8x128xf32>
    %c0_41 = arith.constant 0 : index
    %c0_42 = arith.constant 0 : index
    %233 = vector.load %arg4[%c0_41, %c0_42] : memref<128x5xf32, #tpu.memory_space<vmem>>, vector<128x5xf32>
    %cst_43 = arith.constant dense<0.000000e+00> : vector<8x5xf32>
    %234 = tpu.matmul %232, %233, %cst_43 {dimension_numbers = #tpu.dot_dimension_numbers<[1], [0], [0], [1], [0, 0, 1, 1], [], []>} : vector<8x128xf32>, vector<128x5xf32>, vector<8x5xf32> -> vector<8x5xf32>
    %c0_44 = arith.constant 0 : index
    %c0_45 = arith.constant 0 : index
    %235 = vector.load %arg5[%c0_44, %c0_45] : memref<1x5xf32, #tpu.memory_space<vmem>>, vector<1x5xf32>
    %236 = vector.broadcast %235 : vector<1x5xf32> to vector<8x5xf32>
    %237 = arith.addf %234, %236 : vector<8x5xf32>
    %c0_46 = arith.constant 0 : index
    %c0_47 = arith.constant 0 : index
    %238 = vector.load %arg6[%c0_46, %c0_47] : memref<8x1xi32, #tpu.memory_space<vmem>>, vector<8x1xi32>
    %239 = tpu.iota {dimensions = array<i32: 1>} : vector<8x5xi32>
    %240 = vector.broadcast %238 : vector<8x1xi32> to vector<8x5xi32>
    %241 = arith.cmpi eq, %239, %240 : vector<8x5xi32>
    %242 = arith.extui %241 : vector<8x5xi1> to vector<8x5xi32>
    %243 = arith.sitofp %242 : vector<8x5xi32> to vector<8x5xf32>
    %cst_48 = arith.constant dense<0.000000e+00> : vector<8xf32>
    %244 = vector.multi_reduction <add>, %243, %cst_48 [1] : vector<8x5xf32> to vector<8xf32>
    %245 = vector.shape_cast %244 : vector<8xf32> to vector<8x1xf32>
    %cst_49 = arith.constant dense<0xFF800000> : vector<8xf32>
    %246 = vector.multi_reduction <maximumf>, %237, %cst_49 [1] : vector<8x5xf32> to vector<8xf32>
    %247 = vector.shape_cast %246 : vector<8xf32> to vector<8x1xf32>
    %248 = vector.broadcast %247 : vector<8x1xf32> to vector<8x5xf32>
    %249 = arith.subf %237, %248 : vector<8x5xf32>
    %250 = math.exp %249 : vector<8x5xf32>
    %cst_50 = arith.constant dense<0.000000e+00> : vector<8xf32>
    %251 = vector.multi_reduction <add>, %250, %cst_50 [1] : vector<8x5xf32> to vector<8xf32>
    %252 = vector.shape_cast %251 : vector<8xf32> to vector<8x1xf32>
    %253 = math.log %252 : vector<8x1xf32>
    %254 = arith.addf %247, %253 : vector<8x1xf32>
    %255 = arith.mulf %237, %243 : vector<8x5xf32>
    %cst_51 = arith.constant dense<0.000000e+00> : vector<8xf32>
    %256 = vector.multi_reduction <add>, %255, %cst_51 [1] : vector<8x5xf32> to vector<8xf32>
    %257 = vector.shape_cast %256 : vector<8xf32> to vector<8x1xf32>
    %258 = arith.mulf %245, %254 : vector<8x1xf32>
    %259 = arith.subf %258, %257 : vector<8x1xf32>
    %260 = vector.shape_cast %259 : vector<8x1xf32> to vector<1x8x1xf32>
    %cst_52 = arith.constant dense<0.000000e+00> : vector<1xf32>
    %261 = vector.multi_reduction <add>, %260, %cst_52 [1, 2] : vector<1x8x1xf32> to vector<1xf32>
    %262 = vector.shape_cast %261 : vector<1xf32> to vector<1x1x1xf32>
    %263 = vector.extract %262[0, 0, 0] : f32 from vector<1x1x1xf32>
    %cst_53 = arith.constant 3.000000e+00 : f32
    %264 = arith.divf %263, %cst_53 : f32
    %c0_54 = arith.constant 0 : index
    %c0_55 = arith.constant 0 : index
    %265 = memref.load %arg7[%c0_54, %c0_55] : memref<1x1xf32, #tpu.memory_space<smem>>
    memref.store %264, %arg7[%c0_54, %c0_55] : memref<1x1xf32, #tpu.memory_space<smem>>
    return
  }
}

</mosaic_0001>

<llo_original>
// kernel: model_loss.1
$region0: #{model_loss.1}
  #allocation0 [shape = 'u32[]', space=smem, size = 0x4, offset = 0x4, fixed_abs, tag = 'smem constant byte address 0x4 - core index']
  #allocation1 [shape = 'u32[144,128]{1,0:T(1,128)}', space=vmem, size = 0x12000, scoped, tag = 'internal scratch']
  %s0 = inlined_call_operand.vmem [shape: f32[64,32], index: 0, kind: input, shape index: {}]
  %s1 = inlined_call_operand.vmem [shape: f32[32,512], index: 1, kind: input, shape index: {}]
  %s2 = inlined_call_operand.hbm [shape: f32[128,512], index: 2, kind: input, shape index: {}]
  %s3 = inlined_call_operand.vmem [shape: f32[1,512], index: 3, kind: input, shape index: {}]
  %s4 = inlined_call_operand.vmem [shape: f32[128,5], index: 4, kind: input, shape index: {}]
  %s5 = inlined_call_operand.vmem [shape: f32[1,5], index: 5, kind: input, shape index: {}]
  %s6 = inlined_call_operand.vmem [shape: s32[8,1], index: 6, kind: input, shape index: {}]
  %s7 = inlined_call_operand.hbm [shape: f32[1,1], index: 7, kind: output, shape index: {}]
  %s8 = sld [smem:[#allocation0]]
  $region42: #{model_loss.1} parent=0
    _
  %s10 = ssub.s32 1, %s8
  %s11 = scalar_select 0, %s10, %s8
  $region1: #{model_loss.1} parent=0
    #allocation2 [shape = 'u8[262144]{0}', space=vmem, size = 0x40000, scoped, tag = 'input window, operand 2, single buffered']
    #allocation3 [shape = 's32[1]{0}', space=sflag, size = 0x4, scoped, tag = 'scoped memory for model_loss.1']
    #allocation4 [shape = 's32[1]{0}', space=sflag, size = 0x4, scoped, tag = 'scoped memory for model_loss.1']
    #allocation5 [shape = 'u8[512]{0}', space=smem, size = 0x200, scoped, tag = 'output window, operand 0, single buffered']
    %12 = vsyncpa [#allocation3], 0
    %13 = vsyncpa [#allocation4], 0
    // Predicated region
    $region2: #{model_loss.1} parent=1 // pred_check
      _
    $region3: #{model_loss.1} parent=1 // pred_check_branch
      %15 = sbr.rel (0) target = $region5
    $region4: #{model_loss.1} parent=1 // pred_region
      _
    $region5: #{model_loss.1} parent=1 // pred_fallthru
      _
    // Predicated region
    $region6: #{model_loss.1} parent=1 // pred_check
      _
    $region7: #{model_loss.1} parent=1 // pred_check_branch
      %17 = sbr.rel (0) target = $region9
    $region8: #{model_loss.1} parent=1 // pred_region
      _
    $region9: #{model_loss.1} parent=1 // pred_fallthru
      _
    // Predicated region
    $region10: #{model_loss.1} parent=1 // pred_check
      _
    $region11: #{model_loss.1} parent=1 // pred_check_branch
      %19 = sbr.rel (0) target = $region13
    $region12: #{model_loss.1} parent=1 // pred_region
      %s21 = ssub.s32 8192, 8192
      %22 = vsyncadd [#allocation3], %s21
      %s23 = sshll.u32 [#allocation2], 4
      %s24 = int_to_ptr.vmem [resolvable:$true] %s23
      %29 = dma.hbm_to_vmem [thread:$0]  %s2, 8192, %s24, [#allocation3], 512, 512, 32
    $region13: #{model_loss.1} parent=1 // pred_fallthru
      _
    // Predicated region
    $region14: #{model_loss.1} parent=1 // pred_check
      _
    $region15: #{model_loss.1} parent=1 // pred_check_branch
      %31 = sbr.rel (0) target = $region17
    $region16: #{model_loss.1} parent=1 // pred_region
      _
    $region17: #{model_loss.1} parent=1 // pred_fallthru
      _
    // Predicated region
    $region18: #{model_loss.1} parent=1 // pred_check
      _
    $region19: #{model_loss.1} parent=1 // pred_check_branch
      %33 = sbr.rel (0) target = $region21
    $region20: #{model_loss.1} parent=1 // pred_region
      _
    $region21: #{model_loss.1} parent=1 // pred_fallthru
      _
    // Predicated region
    $region22: #{model_loss.1} parent=1 // pred_check
      _
    $region23: #{model_loss.1} parent=1 // pred_check_branch
      %35 = sbr.rel (0) target = $region25
    $region24: #{model_loss.1} parent=1 // pred_region
      _
    $region25: #{model_loss.1} parent=1 // pred_fallthru
      _
    // Predicated region
    $region26: #{model_loss.1} parent=1 // pred_check
      _
    $region27: #{model_loss.1} parent=1 // pred_check_branch
      %37 = sbr.rel (0) target = $region29
    $region28: #{model_loss.1} parent=1 // pred_region
      _
    $region29: #{model_loss.1} parent=1 // pred_fallthru
      _
    // Predicated region
    $region30: #{model_loss.1} parent=1 // pred_check
      _
    $region31: #{model_loss.1} parent=1 // pred_check_branch
      %39 = sbr.rel (0) target = $region33
    $region32: #{model_loss.1} parent=1 // pred_region
      %40 = dma.done [#allocation3], 8192
    $region33: #{model_loss.1} parent=1 // pred_fallthru
      _
    %v41 = vld [vmem:[%s0] sm:$0xff]
    %v42 = vld [vmem:[%s0 + $0x8] sm:$0xff]
    %v43 = vld [vmem:[%s0 + $0x10] sm:$0xff]
    %v44 = vld [vmem:[%s0 + $0x18] sm:$0xff]
    %v45 = vld [vmem:[%s0 + $0x20] sm:$0xff]
    %v46 = vld [vmem:[%s0 + $0x28] sm:$0xff]
    %v47 = vld [vmem:[%s0 + $0x30] sm:$0xff]
    %v48 = vld [vmem:[%s0 + $0x38] sm:$0xff]
    %v49 = vld [vmem:[%s1] sm:$0xff]
    %v50 = vld [vmem:[%s1 + $0x8] sm:$0xff]
    %v51 = vld [vmem:[%s1 + $0x10] sm:$0xff]
    %v52 = vld [vmem:[%s1 + $0x18] sm:$0xff]
    %v53 = vld [vmem:[%s1 + $0x20] sm:$0xff]
    %v54 = vld [vmem:[%s1 + $0x28] sm:$0xff]
    %v55 = vld [vmem:[%s1 + $0x30] sm:$0xff]
    %v56 = vld [vmem:[%s1 + $0x38] sm:$0xff]
    %v57 = vld [vmem:[%s1 + $0x40] sm:$0xff]
    %v58 = vld [vmem:[%s1 + $0x48] sm:$0xff]
    %v59 = vld [vmem:[%s1 + $0x50] sm:$0xff]
    %v60 = vld [vmem:[%s1 + $0x58] sm:$0xff]
    %v61 = vld [vmem:[%s1 + $0x60] sm:$0xff]
    %v62 = vld [vmem:[%s1 + $0x68] sm:$0xff]
    %v63 = vld [vmem:[%s1 + $0x70] sm:$0xff]
    %v64 = vld [vmem:[%s1 + $0x78] sm:$0xff]
    %v65 = vld [vmem:[%s3] sm:$0xf]
    %v67 = vlaneseq
    %v68 = vshrl.u32 %v67, 7
    %v69 = vsub.s32 0, %v68
    %v70 = vrot.slane %v65, %v69
    %v71 = vlaneseq
    %v72 = vshrl.u32 %v71, 7
    %v73 = vsub.s32 1, %v72
    %v74 = vrot.slane %v65, %v73
    %v75 = vlaneseq
    %v76 = vshrl.u32 %v75, 7
    %v77 = vsub.s32 2, %v76
    %v78 = vrot.slane %v65, %v77
    %v79 = vlaneseq
    %v80 = vshrl.u32 %v79, 7
    %v81 = vsub.s32 3, %v80
    %v82 = vrot.slane %v65, %v81
    %vm87 = vcmask 261120
    %v89 = vsel %vm87, %v41, 0
    %v92 = vsel %vm87, %v42, 0
    %v95 = vsel %vm87, %v43, 0
    %v98 = vsel %vm87, %v44, 0
    %v101 = vsel %vm87, %v45, 0
    %v104 = vsel %vm87, %v46, 0
    %v107 = vsel %vm87, %v47, 0
    %v110 = vsel %vm87, %v48, 0
    %112 = vmatprep.subr.mxu0 0.0
    %113 = vmatpush1.msra.mxu0 0.0
    %114 = vmatprep.subr.mxu0 0.0
    %115 = vmatpush1.msra.mxu0 0.0
    %116 = vmatprep.subr.mxu0 0.0
    %117 = vmatpush1.msra.mxu0 0.0
    %118 = vmatprep.subr.mxu0 0.0
    %119 = vmatpush1.msra.mxu0 0.0
    %120 = vmatprep.subr.mxu0 0.0
    %121 = vmatpush1.msra.mxu0 0.0
    %122 = vmatprep.subr.mxu0 0.0
    %123 = vmatpush1.msra.mxu0 0.0
    %124 = vmatprep.subr.mxu0 0.0
    %125 = vmatpush1.msra.mxu0 0.0
    %126 = vmatprep.subr.mxu0 0.0
    %127 = vmatpush1.msra.mxu0 0.0
    %128 = vmatprep.subr.mxu0 0.0
    %129 = vmatpush1.msra.mxu0 0.0
    %130 = vmatprep.subr.mxu0 0.0
    %131 = vmatpush1.msra.mxu0 0.0
    %132 = vmatprep.subr.mxu0 0.0
    %133 = vmatpush1.msra.mxu0 0.0
    %134 = vmatprep.subr.mxu0 0.0
    %135 = vmatpush1.msra.mxu0 0.0
    %136 = vmatprep.subr.mxu0 %v62
    %137 = vmatpush1.msra.mxu0 %v61
    %138 = vmatprep.subr.mxu0 %v58
    %139 = vmatpush1.msra.mxu0 %v57
    %140 = vmatprep.subr.mxu0 %v54
    %141 = vmatpush1.msra.mxu0 %v53
    %142 = vmatprep.subr.mxu0 %v50
    %143 = vmatpush1.msra.mxu0 %v49
    %144 = vmatprep.subr.mxu0 0.0
    %145 = vmatpush2.msra.mxu0 0.0
    %146 = vmatprep.subr.mxu0 0.0
    %147 = vmatpush2.msra.mxu0 0.0
    %148 = vmatprep.subr.mxu0 0.0
    %149 = vmatpush2.msra.mxu0 0.0
    %150 = vmatprep.subr.mxu0 0.0
    %151 = vmatpush2.msra.mxu0 0.0
    %152 = vmatprep.subr.mxu0 0.0
    %153 = vmatpush2.msra.mxu0 0.0
    %154 = vmatprep.subr.mxu0 0.0
    %155 = vmatpush2.msra.mxu0 0.0
    %156 = vmatprep.subr.mxu0 0.0
    %157 = vmatpush2.msra.mxu0 0.0
    %158 = vmatprep.subr.mxu0 0.0
    %159 = vmatpush2.msra.mxu0 0.0
    %160 = vmatprep.subr.mxu0 0.0
    %161 = vmatpush2.msra.mxu0 0.0
    %162 = vmatprep.subr.mxu0 0.0
    %163 = vmatpush2.msra.mxu0 0.0
    %164 = vmatprep.subr.mxu0 0.0
    %165 = vmatpush2.msra.mxu0 0.0
    %166 = vmatprep.subr.mxu0 0.0
    %167 = vmatpush2.msra.mxu0 0.0
    %168 = vmatprep.subr.mxu0 0.0
    %169 = vmatpush2.msra.mxu0 0.0
    %170 = vmatprep.subr.mxu0 0.0
    %171 = vmatpush2.msra.mxu0 0.0
    %172 = vmatprep.subr.mxu0 0.0
    %173 = vmatpush2.msra.mxu0 0.0
    %174 = vmatprep.subr.mxu0 0.0
    %175 = vmatpush2.msra.mxu0 0.0
    %176 = vmatprep.mubr.f32.mxu0 0.0
    %177 = vmatmul.mubr.f32.gmra.mxu0 %v89
    %v178 = vpop.f32.mrf.mxu0
    %v179 = vadd.f32 %v70, %v178
    %v180 = vpop.f32.mrf.mxu0
    %v181 = vadd.f32 %v74, %v180
    %182 = vmatprep.mubr.f32.mxu0 0.0
    %183 = vmatmul.mubr.f32.gmra.mxu0 %v92
    %v184 = vpop.f32.mrf.mxu0
    %v185 = vadd.f32 %v70, %v184
    %v186 = vpop.f32.mrf.mxu0
    %v187 = vadd.f32 %v74, %v186
    %188 = vmatprep.mubr.f32.mxu0 0.0
    %189 = vmatmul.mubr.f32.gmra.mxu0 %v95
    %v190 = vpop.f32.mrf.mxu0
    %v191 = vadd.f32 %v70, %v190
    %v192 = vpop.f32.mrf.mxu0
    %v193 = vadd.f32 %v74, %v192
    %194 = vmatprep.mubr.f32.mxu0 0.0
    %195 = vmatmul.mubr.f32.gmra.mxu0 %v98
    %v196 = vpop.f32.mrf.mxu0
    %v197 = vadd.f32 %v70, %v196
    %v198 = vpop.f32.mrf.mxu0
    %v199 = vadd.f32 %v74, %v198
    %200 = vmatprep.mubr.f32.mxu0 0.0
    %201 = vmatmul.mubr.f32.gmra.mxu0 %v101
    %v202 = vpop.f32.mrf.mxu0
    %v203 = vadd.f32 %v70, %v202
    %v204 = vpop.f32.mrf.mxu0
    %v205 = vadd.f32 %v74, %v204
    %206 = vmatprep.mubr.f32.mxu0 0.0
    %207 = vmatmul.mubr.f32.gmra.mxu0 %v104
    %v208 = vpop.f32.mrf.mxu0
    %v209 = vadd.f32 %v70, %v208
    %v210 = vpop.f32.mrf.mxu0
    %v211 = vadd.f32 %v74, %v210
    %212 = vmatprep.mubr.f32.mxu0 0.0
    %213 = vmatmul.mubr.f32.gmra.mxu0 %v107
    %v214 = vpop.f32.mrf.mxu0
    %v215 = vadd.f32 %v70, %v214
    %v216 = vpop.f32.mrf.mxu0
    %v217 = vadd.f32 %v74, %v216
    %218 = vmatprep.mubr.f32.mxu0 0.0
    %219 = vmatmul.mubr.f32.gmra.mxu0 %v110
    %v220 = vpop.f32.mrf.mxu0
    %v221 = vadd.f32 %v70, %v220
    %v222 = vpop.f32.mrf.mxu0
    %v223 = vadd.f32 %v74, %v222
    %224 = vdwg.mxu0
    %225 = vmatprep.subr.mxu0 0.0
    %226 = vmatpush1.msra.mxu0 0.0
    %227 = vmatprep.subr.mxu0 0.0
    %228 = vmatpush1.msra.mxu0 0.0
    %229 = vmatprep.subr.mxu0 0.0
    %230 = vmatpush1.msra.mxu0 0.0
    %231 = vmatprep.subr.mxu0 0.0
    %232 = vmatpush1.msra.mxu0 0.0
    %233 = vmatprep.subr.mxu0 0.0
    %234 = vmatpush1.msra.mxu0 0.0
    %235 = vmatprep.subr.mxu0 0.0
    %236 = vmatpush1.msra.mxu0 0.0
    %237 = vmatprep.subr.mxu0 0.0
    %238 = vmatpush1.msra.mxu0 0.0
    %239 = vmatprep.subr.mxu0 0.0
    %240 = vmatpush1.msra.mxu0 0.0
    %241 = vmatprep.subr.mxu0 0.0
    %242 = vmatpush1.msra.mxu0 0.0
    %243 = vmatprep.subr.mxu0 0.0
    %244 = vmatpush1.msra.mxu0 0.0
    %245 = vmatprep.subr.mxu0 0.0
    %246 = vmatpush1.msra.mxu0 0.0
    %247 = vmatprep.subr.mxu0 0.0
    %248 = vmatpush1.msra.mxu0 0.0
    %249 = vmatprep.subr.mxu0 %v64
    %250 = vmatpush1.msra.mxu0 %v63
    %251 = vmatprep.subr.mxu0 %v60
    %252 = vmatpush1.msra.mxu0 %v59
    %253 = vmatprep.subr.mxu0 %v56
    %254 = vmatpush1.msra.mxu0 %v55
    %255 = vmatprep.subr.mxu0 %v52
    %256 = vmatpush1.msra.mxu0 %v51
    %257 = vmatprep.subr.mxu0 0.0
    %258 = vmatpush2.msra.mxu0 0.0
    %259 = vmatprep.subr.mxu0 0.0
    %260 = vmatpush2.msra.mxu0 0.0
    %261 = vmatprep.subr.mxu0 0.0
    %262 = vmatpush2.msra.mxu0 0.0
    %263 = vmatprep.subr.mxu0 0.0
    %264 = vmatpush2.msra.mxu0 0.0
    %265 = vmatprep.subr.mxu0 0.0
    %266 = vmatpush2.msra.mxu0 0.0
    %267 = vmatprep.subr.mxu0 0.0
    %268 = vmatpush2.msra.mxu0 0.0
    %269 = vmatprep.subr.mxu0 0.0
    %270 = vmatpush2.msra.mxu0 0.0
    %271 = vmatprep.subr.mxu0 0.0
    %272 = vmatpush2.msra.mxu0 0.0
    %273 = vmatprep.subr.mxu0 0.0
    %274 = vmatpush2.msra.mxu0 0.0
    %275 = vmatprep.subr.mxu0 0.0
    %276 = vmatpush2.msra.mxu0 0.0
    %277 = vmatprep.subr.mxu0 0.0
    %278 = vmatpush2.msra.mxu0 0.0
    %279 = vmatprep.subr.mxu0 0.0
    %280 = vmatpush2.msra.mxu0 0.0
    %281 = vmatprep.subr.mxu0 0.0
    %282 = vmatpush2.msra.mxu0 0.0
    %283 = vmatprep.subr.mxu0 0.0
    %284 = vmatpush2.msra.mxu0 0.0
    %285 = vmatprep.subr.mxu0 0.0
    %286 = vmatpush2.msra.mxu0 0.0
    %287 = vmatprep.subr.mxu0 0.0
    %288 = vmatpush2.msra.mxu0 0.0
    %289 = vmatprep.mubr.f32.mxu0 0.0
    %290 = vmatmul.mubr.f32.gmra.mxu0 %v89
    %v291 = vpop.f32.mrf.mxu0
    %v292 = vadd.f32 %v78, %v291
    %v293 = vpop.f32.mrf.mxu0
    %v294 = vadd.f32 %v82, %v293
    %295 = vmatprep.mubr.f32.mxu0 0.0
    %296 = vmatmul.mubr.f32.gmra.mxu0 %v92
    %v297 = vpop.f32.mrf.mxu0
    %v298 = vadd.f32 %v78, %v297
    %v299 = vpop.f32.mrf.mxu0
    %v300 = vadd.f32 %v82, %v299
    %301 = vmatprep.mubr.f32.mxu0 0.0
    %302 = vmatmul.mubr.f32.gmra.mxu0 %v95
    %v303 = vpop.f32.mrf.mxu0
    %v304 = vadd.f32 %v78, %v303
    %v305 = vpop.f32.mrf.mxu0
    %v306 = vadd.f32 %v82, %v305
    %307 = vmatprep.mubr.f32.mxu0 0.0
    %308 = vmatmul.mubr.f32.gmra.mxu0 %v98
    %v309 = vpop.f32.mrf.mxu0
    %v310 = vadd.f32 %v78, %v309
    %v311 = vpop.f32.mrf.mxu0
    %v312 = vadd.f32 %v82, %v311
    %313 = vmatprep.mubr.f32.mxu0 0.0
    %314 = vmatmul.mubr.f32.gmra.mxu0 %v101
    %v315 = vpop.f32.mrf.mxu0
    %v316 = vadd.f32 %v78, %v315
    %v317 = vpop.f32.mrf.mxu0
    %v318 = vadd.f32 %v82, %v317
    %319 = vmatprep.mubr.f32.mxu0 0.0
    %320 = vmatmul.mubr.f32.gmra.mxu0 %v104
    %v321 = vpop.f32.mrf.mxu0
    %v322 = vadd.f32 %v78, %v321
    %v323 = vpop.f32.mrf.mxu0
    %v324 = vadd.f32 %v82, %v323
    %325 = vmatprep.mubr.f32.mxu0 0.0
    %326 = vmatmul.mubr.f32.gmra.mxu0 %v107
    %v327 = vpop.f32.mrf.mxu0
    %v328 = vadd.f32 %v78, %v327
    %v329 = vpop.f32.mrf.mxu0
    %v330 = vadd.f32 %v82, %v329
    %331 = vmatprep.mubr.f32.mxu0 0.0
    %332 = vmatmul.mubr.f32.gmra.mxu0 %v110
    %v333 = vpop.f32.mrf.mxu0
    %v334 = vadd.f32 %v78, %v333
    %v335 = vpop.f32.mrf.mxu0
    %v336 = vadd.f32 %v82, %v335
    %337 = vdwg.mxu0
    %v338 = vld [vmem:[#allocation2] sm:$0xff]
    %v339 = vld [vmem:[#allocation2 + $0x8] sm:$0xff]
    %v340 = vld [vmem:[#allocation2 + $0x10] sm:$0xff]
    %v341 = vld [vmem:[#allocation2 + $0x18] sm:$0xff]
    %v342 = vld [vmem:[#allocation2 + $0x20] sm:$0xff]
    %v343 = vld [vmem:[#allocation2 + $0x28] sm:$0xff]
    %v344 = vld [vmem:[#allocation2 + $0x30] sm:$0xff]
    %v345 = vld [vmem:[#allocation2 + $0x38] sm:$0xff]
    %v346 = vld [vmem:[#allocation2 + $0x40] sm:$0xff]
    %v347 = vld [vmem:[#allocation2 + $0x48] sm:$0xff]
    %v348 = vld [vmem:[#allocation2 + $0x50] sm:$0xff]
    %v349 = vld [vmem:[#allocation2 + $0x58] sm:$0xff]
    %v350 = vld [vmem:[#allocation2 + $0x60] sm:$0xff]
    %v351 = vld [vmem:[#allocation2 + $0x68] sm:$0xff]
    %v352 = vld [vmem:[#allocation2 + $0x70] sm:$0xff]
    %v353 = vld [vmem:[#allocation2 + $0x78] sm:$0xff]
    %v354 = vld [vmem:[#allocation2 + $0x80] sm:$0xff]
    %v355 = vld [vmem:[#allocation2 + $0x88] sm:$0xff]
    %v356 = vld [vmem:[#allocation2 + $0x90] sm:$0xff]
    %v357 = vld [vmem:[#allocation2 + $0x98] sm:$0xff]
    %v358 = vld [vmem:[#allocation2 + $0xa0] sm:$0xff]
    %v359 = vld [vmem:[#allocation2 + $0xa8] sm:$0xff]
    %v360 = vld [vmem:[#allocation2 + $0xb0] sm:$0xff]
    %v361 = vld [vmem:[#allocation2 + $0xb8] sm:$0xff]
    %v362 = vld [vmem:[#allocation2 + $0xc0] sm:$0xff]
    %v363 = vld [vmem:[#allocation2 + $0xc8] sm:$0xff]
    %v364 = vld [vmem:[#allocation2 + $0xd0] sm:$0xff]
    %v365 = vld [vmem:[#allocation2 + $0xd8] sm:$0xff]
    %v366 = vld [vmem:[#allocation2 + $0xe0] sm:$0xff]
    %v367 = vld [vmem:[#allocation2 + $0xe8] sm:$0xff]
    %v368 = vld [vmem:[#allocation2 + $0xf0] sm:$0xff]
    %v369 = vld [vmem:[#allocation2 + $0xf8] sm:$0xff]
    %v370 = vld [vmem:[#allocation2 + $0x100] sm:$0xff]
    %v371 = vld [vmem:[#allocation2 + $0x108] sm:$0xff]
    %v372 = vld [vmem:[#allocation2 + $0x110] sm:$0xff]
    %v373 = vld [vmem:[#allocation2 + $0x118] sm:$0xff]
    %v374 = vld [vmem:[#allocation2 + $0x120] sm:$0xff]
    %v375 = vld [vmem:[#allocation2 + $0x128] sm:$0xff]
    %v376 = vld [vmem:[#allocation2 + $0x130] sm:$0xff]
    %v377 = vld [vmem:[#allocation2 + $0x138] sm:$0xff]
    %v378 = vld [vmem:[#allocation2 + $0x140] sm:$0xff]
    %v379 = vld [vmem:[#allocation2 + $0x148] sm:$0xff]
    %v380 = vld [vmem:[#allocation2 + $0x150] sm:$0xff]
    %v381 = vld [vmem:[#allocation2 + $0x158] sm:$0xff]
    %v382 = vld [vmem:[#allocation2 + $0x160] sm:$0xff]
    %v383 = vld [vmem:[#allocation2 + $0x168] sm:$0xff]
    %v384 = vld [vmem:[#allocation2 + $0x170] sm:$0xff]
    %v385 = vld [vmem:[#allocation2 + $0x178] sm:$0xff]
    %v386 = vld [vmem:[#allocation2 + $0x180] sm:$0xff]
    %v387 = vld [vmem:[#allocation2 + $0x188] sm:$0xff]
    %v388 = vld [vmem:[#allocation2 + $0x190] sm:$0xff]
    %v389 = vld [vmem:[#allocation2 + $0x198] sm:$0xff]
    %v390 = vld [vmem:[#allocation2 + $0x1a0] sm:$0xff]
    %v391 = vld [vmem:[#allocation2 + $0x1a8] sm:$0xff]
    %v392 = vld [vmem:[#allocation2 + $0x1b0] sm:$0xff]
    %v393 = vld [vmem:[#allocation2 + $0x1b8] sm:$0xff]
    %v394 = vld [vmem:[#allocation2 + $0x1c0] sm:$0xff]
    %v395 = vld [vmem:[#allocation2 + $0x1c8] sm:$0xff]
    %v396 = vld [vmem:[#allocation2 + $0x1d0] sm:$0xff]
    %v397 = vld [vmem:[#allocation2 + $0x1d8] sm:$0xff]
    %v398 = vld [vmem:[#allocation2 + $0x1e0] sm:$0xff]
    %v399 = vld [vmem:[#allocation2 + $0x1e8] sm:$0xff]
    %v400 = vld [vmem:[#allocation2 + $0x1f0] sm:$0xff]
    %v401 = vld [vmem:[#allocation2 + $0x1f8] sm:$0xff]
    %402 = vmatprep.subr.mxu0 %v399
    %403 = vmatpush1.msra.mxu0 %v398
    %404 = vmatprep.subr.mxu0 %v395
    %405 = vmatpush1.msra.mxu0 %v394
    %406 = vmatprep.subr.mxu0 %v391
    %407 = vmatpush1.msra.mxu0 %v390
    %408 = vmatprep.subr.mxu0 %v387
    %409 = vmatpush1.msra.mxu0 %v386
    %410 = vmatprep.subr.mxu0 %v383
    %411 = vmatpush1.msra.mxu0 %v382
    %412 = vmatprep.subr.mxu0 %v379
    %413 = vmatpush1.msra.mxu0 %v378
    %414 = vmatprep.subr.mxu0 %v375
    %415 = vmatpush1.msra.mxu0 %v374
    %416 = vmatprep.subr.mxu0 %v371
    %417 = vmatpush1.msra.mxu0 %v370
    %418 = vmatprep.subr.mxu0 %v367
    %419 = vmatpush1.msra.mxu0 %v366
    %420 = vmatprep.subr.mxu0 %v363
    %421 = vmatpush1.msra.mxu0 %v362
    %422 = vmatprep.subr.mxu0 %v359
    %423 = vmatpush1.msra.mxu0 %v358
    %424 = vmatprep.subr.mxu0 %v355
    %425 = vmatpush1.msra.mxu0 %v354
    %426 = vmatprep.subr.mxu0 %v351
    %427 = vmatpush1.msra.mxu0 %v350
    %428 = vmatprep.subr.mxu0 %v347
    %429 = vmatpush1.msra.mxu0 %v346
    %430 = vmatprep.subr.mxu0 %v343
    %431 = vmatpush1.msra.mxu0 %v342
    %432 = vmatprep.subr.mxu0 %v339
    %433 = vmatpush1.msra.mxu0 %v338
    %434 = vmatprep.subr.mxu0 0.0
    %435 = vmatpush2.msra.mxu0 0.0
    %436 = vmatprep.subr.mxu0 0.0
    %437 = vmatpush2.msra.mxu0 0.0
    %438 = vmatprep.subr.mxu0 0.0
    %439 = vmatpush2.msra.mxu0 0.0
    %440 = vmatprep.subr.mxu0 0.0
    %441 = vmatpush2.msra.mxu0 0.0
    %442 = vmatprep.subr.mxu0 0.0
    %443 = vmatpush2.msra.mxu0 0.0
    %444 = vmatprep.subr.mxu0 0.0
    %445 = vmatpush2.msra.mxu0 0.0
    %446 = vmatprep.subr.mxu0 0.0
    %447 = vmatpush2.msra.mxu0 0.0
    %448 = vmatprep.subr.mxu0 0.0
    %449 = vmatpush2.msra.mxu0 0.0
    %450 = vmatprep.subr.mxu0 0.0
    %451 = vmatpush2.msra.mxu0 0.0
    %452 = vmatprep.subr.mxu0 0.0
    %453 = vmatpush2.msra.mxu0 0.0
    %454 = vmatprep.subr.mxu0 0.0
    %455 = vmatpush2.msra.mxu0 0.0
    %456 = vmatprep.subr.mxu0 0.0
    %457 = vmatpush2.msra.mxu0 0.0
    %458 = vmatprep.subr.mxu0 0.0
    %459 = vmatpush2.msra.mxu0 0.0
    %460 = vmatprep.subr.mxu0 0.0
    %461 = vmatpush2.msra.mxu0 0.0
    %462 = vmatprep.subr.mxu0 0.0
    %463 = vmatpush2.msra.mxu0 0.0
    %464 = vmatprep.subr.mxu0 0.0
    %465 = vmatpush2.msra.mxu0 0.0
    %466 = vmatprep.mubr.f32.mxu0 0.0
    %467 = vmatmul.mubr.f32.gmra.mxu0 0.0
    %v468 = vpop.f32.mrf.mxu0
    %v469 = vadd.f32 0.0, %v468
    %v470 = vpop.f32.mrf.mxu0
    %v471 = vadd.f32 0.0, %v470
    %472 = vdwg.mxu0
    %473 = vmatprep.subr.mxu0 %v401
    %474 = vmatpush1.msra.mxu0 %v400
    %475 = vmatprep.subr.mxu0 %v397
    %476 = vmatpush1.msra.mxu0 %v396
    %477 = vmatprep.subr.mxu0 %v393
    %478 = vmatpush1.msra.mxu0 %v392
    %479 = vmatprep.subr.mxu0 %v389
    %480 = vmatpush1.msra.mxu0 %v388
    %481 = vmatprep.subr.mxu0 %v385
    %482 = vmatpush1.msra.mxu0 %v384
    %483 = vmatprep.subr.mxu0 %v381
    %484 = vmatpush1.msra.mxu0 %v380
    %485 = vmatprep.subr.mxu0 %v377
    %486 = vmatpush1.msra.mxu0 %v376
    %487 = vmatprep.subr.mxu0 %v373
    %488 = vmatpush1.msra.mxu0 %v372
    %489 = vmatprep.subr.mxu0 %v369
    %490 = vmatpush1.msra.mxu0 %v368
    %491 = vmatprep.subr.mxu0 %v365
    %492 = vmatpush1.msra.mxu0 %v364
    %493 = vmatprep.subr.mxu0 %v361
    %494 = vmatpush1.msra.mxu0 %v360
    %495 = vmatprep.subr.mxu0 %v357
    %496 = vmatpush1.msra.mxu0 %v356
    %497 = vmatprep.subr.mxu0 %v353
    %498 = vmatpush1.msra.mxu0 %v352
    %499 = vmatprep.subr.mxu0 %v349
    %500 = vmatpush1.msra.mxu0 %v348
    %501 = vmatprep.subr.mxu0 %v345
    %502 = vmatpush1.msra.mxu0 %v344
    %503 = vmatprep.subr.mxu0 %v341
    %504 = vmatpush1.msra.mxu0 %v340
    %505 = vmatprep.subr.mxu0 0.0
    %506 = vmatpush2.msra.mxu0 0.0
    %507 = vmatprep.subr.mxu0 0.0
    %508 = vmatpush2.msra.mxu0 0.0
    %509 = vmatprep.subr.mxu0 0.0
    %510 = vmatpush2.msra.mxu0 0.0
    %511 = vmatprep.subr.mxu0 0.0
    %512 = vmatpush2.msra.mxu0 0.0
    %513 = vmatprep.subr.mxu0 0.0
    %514 = vmatpush2.msra.mxu0 0.0
    %515 = vmatprep.subr.mxu0 0.0
    %516 = vmatpush2.msra.mxu0 0.0
    %517 = vmatprep.subr.mxu0 0.0
    %518 = vmatpush2.msra.mxu0 0.0
    %519 = vmatprep.subr.mxu0 0.0
    %520 = vmatpush2.msra.mxu0 0.0
    %521 = vmatprep.subr.mxu0 0.0
    %522 = vmatpush2.msra.mxu0 0.0
    %523 = vmatprep.subr.mxu0 0.0
    %524 = vmatpush2.msra.mxu0 0.0
    %525 = vmatprep.subr.mxu0 0.0
    %526 = vmatpush2.msra.mxu0 0.0
    %527 = vmatprep.subr.mxu0 0.0
    %528 = vmatpush2.msra.mxu0 0.0
    %529 = vmatprep.subr.mxu0 0.0
    %530 = vmatpush2.msra.mxu0 0.0
    %531 = vmatprep.subr.mxu0 0.0
    %532 = vmatpush2.msra.mxu0 0.0
    %533 = vmatprep.subr.mxu0 0.0
    %534 = vmatpush2.msra.mxu0 0.0
    %535 = vmatprep.subr.mxu0 0.0
    %536 = vmatpush2.msra.mxu0 0.0
    %537 = vmatprep.mubr.f32.mxu0 0.0
    %538 = vmatmul.mubr.f32.gmra.mxu0 0.0
    %v539 = vpop.f32.mrf.mxu0
    %v540 = vadd.f32 0.0, %v539
    %v541 = vpop.f32.mrf.mxu0
    %v542 = vadd.f32 0.0, %v541
    %543 = vdwg.mxu0
    %v544 = vadd.f32 %v179, %v469
    %v545 = vadd.f32 %v181, %v471
    %v546 = vadd.f32 %v292, %v540
    %v547 = vadd.f32 %v294, %v542
    %v548 = vxor.u32 %v544, 2147483648
    %v549 = vmul.f32 %v548, 1.442695
    %v550 = vpow.pop %v549
    %v551 = vadd.f32 %v550, 1.0
    %v552 = vrcp.pop %v551
    %v553 = vmul.f32 1.0, %v552
    %v554 = vxor.u32 %v545, 2147483648
    %v555 = vmul.f32 %v554, 1.442695
    %v556 = vpow.pop %v555
    %v557 = vadd.f32 %v556, 1.0
    %v558 = vrcp.pop %v557
    %v559 = vmul.f32 1.0, %v558
    %v560 = vtanh.pop %v546
    %v561 = vxor.u32 %v547, 2147483648
    %v562 = vmul.f32 %v561, 1.442695
    %v563 = vpow.pop %v562
    %v564 = vadd.f32 %v563, 1.0
    %v565 = vrcp.pop %v564
    %v566 = vmul.f32 1.0, %v565
    %v567 = vmul.f32 %v559, 0.0
    %v568 = vmul.f32 %v553, %v560
    %v569 = vadd.f32 %v567, %v568
    %v570 = vtanh.pop %v569
    %v571 = vmul.f32 %v566, %v570
    %572 = vmatprep.subr.mxu0 %v399
    %573 = vmatpush1.msra.mxu0 %v398
    %574 = vmatprep.subr.mxu0 %v395
    %575 = vmatpush1.msra.mxu0 %v394
    %576 = vmatprep.subr.mxu0 %v391
    %577 = vmatpush1.msra.mxu0 %v390
    %578 = vmatprep.subr.mxu0 %v387
    %579 = vmatpush1.msra.mxu0 %v386
    %580 = vmatprep.subr.mxu0 %v383
    %581 = vmatpush1.msra.mxu0 %v382
    %582 = vmatprep.subr.mxu0 %v379
    %583 = vmatpush1.msra.mxu0 %v378
    %584 = vmatprep.subr.mxu0 %v375
    %585 = vmatpush1.msra.mxu0 %v374
    %586 = vmatprep.subr.mxu0 %v371
    %587 = vmatpush1.msra.mxu0 %v370
    %588 = vmatprep.subr.mxu0 %v367
    %589 = vmatpush1.msra.mxu0 %v366
    %590 = vmatprep.subr.mxu0 %v363
    %591 = vmatpush1.msra.mxu0 %v362
    %592 = vmatprep.subr.mxu0 %v359
    %593 = vmatpush1.msra.mxu0 %v358
    %594 = vmatprep.subr.mxu0 %v355
    %595 = vmatpush1.msra.mxu0 %v354
    %596 = vmatprep.subr.mxu0 %v351
    %597 = vmatpush1.msra.mxu0 %v350
    %598 = vmatprep.subr.mxu0 %v347
    %599 = vmatpush1.msra.mxu0 %v346
    %600 = vmatprep.subr.mxu0 %v343
    %601 = vmatpush1.msra.mxu0 %v342
    %602 = vmatprep.subr.mxu0 %v339
    %603 = vmatpush1.msra.mxu0 %v338
    %604 = vmatprep.subr.mxu0 0.0
    %605 = vmatpush2.msra.mxu0 0.0
    %606 = vmatprep.subr.mxu0 0.0
    %607 = vmatpush2.msra.mxu0 0.0
    %608 = vmatprep.subr.mxu0 0.0
    %609 = vmatpush2.msra.mxu0 0.0
    %610 = vmatprep.subr.mxu0 0.0
    %611 = vmatpush2.msra.mxu0 0.0
    %612 = vmatprep.subr.mxu0 0.0
    %613 = vmatpush2.msra.mxu0 0.0
    %614 = vmatprep.subr.mxu0 0.0
    %615 = vmatpush2.msra.mxu0 0.0
    %616 = vmatprep.subr.mxu0 0.0
    %617 = vmatpush2.msra.mxu0 0.0
    %618 = vmatprep.subr.mxu0 0.0
    %619 = vmatpush2.msra.mxu0 0.0
    %620 = vmatprep.subr.mxu0 0.0
    %621 = vmatpush2.msra.mxu0 0.0
    %622 = vmatprep.subr.mxu0 0.0
    %623 = vmatpush2.msra.mxu0 0.0
    %624 = vmatprep.subr.mxu0 0.0
    %625 = vmatpush2.msra.mxu0 0.0
    %626 = vmatprep.subr.mxu0 0.0
    %627 = vmatpush2.msra.mxu0 0.0
    %628 = vmatprep.subr.mxu0 0.0
    %629 = vmatpush2.msra.mxu0 0.0
    %630 = vmatprep.subr.mxu0 0.0
    %631 = vmatpush2.msra.mxu0 0.0
    %632 = vmatprep.subr.mxu0 0.0
    %633 = vmatpush2.msra.mxu0 0.0
    %634 = vmatprep.subr.mxu0 0.0
    %635 = vmatpush2.msra.mxu0 0.0
    %636 = vmatprep.mubr.f32.mxu0 0.0
    %637 = vmatmul.mubr.f32.gmra.mxu0 %v571
    %v638 = vpop.f32.mrf.mxu0
    %v639 = vadd.f32 0.0, %v638
    %v640 = vpop.f32.mrf.mxu0
    %v641 = vadd.f32 0.0, %v640
    %642 = vdwg.mxu0
    %643 = vmatprep.subr.mxu0 %v401
    %644 = vmatpush1.msra.mxu0 %v400
    %645 = vmatprep.subr.mxu0 %v397
    %646 = vmatpush1.msra.mxu0 %v396
    %647 = vmatprep.subr.mxu0 %v393
    %648 = vmatpush1.msra.mxu0 %v392
    %649 = vmatprep.subr.mxu0 %v389
    %650 = vmatpush1.msra.mxu0 %v388
    %651 = vmatprep.subr.mxu0 %v385
    %652 = vmatpush1.msra.mxu0 %v384
    %653 = vmatprep.subr.mxu0 %v381
    %654 = vmatpush1.msra.mxu0 %v380
    %655 = vmatprep.subr.mxu0 %v377
    %656 = vmatpush1.msra.mxu0 %v376
    %657 = vmatprep.subr.mxu0 %v373
    %658 = vmatpush1.msra.mxu0 %v372
    %659 = vmatprep.subr.mxu0 %v369
    %660 = vmatpush1.msra.mxu0 %v368
    %661 = vmatprep.subr.mxu0 %v365
    %662 = vmatpush1.msra.mxu0 %v364
    %663 = vmatprep.subr.mxu0 %v361
    %664 = vmatpush1.msra.mxu0 %v360
    %665 = vmatprep.subr.mxu0 %v357
    %666 = vmatpush1.msra.mxu0 %v356
    %667 = vmatprep.subr.mxu0 %v353
    %668 = vmatpush1.msra.mxu0 %v352
    %669 = vmatprep.subr.mxu0 %v349
    %670 = vmatpush1.msra.mxu0 %v348
    %671 = vmatprep.subr.mxu0 %v345
    %672 = vmatpush1.msra.mxu0 %v344
    %673 = vmatprep.subr.mxu0 %v341
    %674 = vmatpush1.msra.mxu0 %v340
    %675 = vmatprep.subr.mxu0 0.0
    %676 = vmatpush2.msra.mxu0 0.0
    %677 = vmatprep.subr.mxu0 0.0
    %678 = vmatpush2.msra.mxu0 0.0
    %679 = vmatprep.subr.mxu0 0.0
    %680 = vmatpush2.msra.mxu0 0.0
    %681 = vmatprep.subr.mxu0 0.0
    %682 = vmatpush2.msra.mxu0 0.0
    %683 = vmatprep.subr.mxu0 0.0
    %684 = vmatpush2.msra.mxu0 0.0
    %685 = vmatprep.subr.mxu0 0.0
    %686 = vmatpush2.msra.mxu0 0.0
    %687 = vmatprep.subr.mxu0 0.0
    %688 = vmatpush2.msra.mxu0 0.0
    %689 = vmatprep.subr.mxu0 0.0
    %690 = vmatpush2.msra.mxu0 0.0
    %691 = vmatprep.subr.mxu0 0.0
    %692 = vmatpush2.msra.mxu0 0.0
    %693 = vmatprep.subr.mxu0 0.0
    %694 = vmatpush2.msra.mxu0 0.0
    %695 = vmatprep.subr.mxu0 0.0
    %696 = vmatpush2.msra.mxu0 0.0
    %697 = vmatprep.subr.mxu0 0.0
    %698 = vmatpush2.msra.mxu0 0.0
    %699 = vmatprep.subr.mxu0 0.0
    %700 = vmatpush2.msra.mxu0 0.0
    %701 = vmatprep.subr.mxu0 0.0
    %702 = vmatpush2.msra.mxu0 0.0
    %703 = vmatprep.subr.mxu0 0.0
    %704 = vmatpush2.msra.mxu0 0.0
    %705 = vmatprep.subr.mxu0 0.0
    %706 = vmatpush2.msra.mxu0 0.0
    %707 = vmatprep.mubr.f32.mxu0 0.0
    %708 = vmatmul.mubr.f32.gmra.mxu0 %v571
    %v709 = vpop.f32.mrf.mxu0
    %v710 = vadd.f32 0.0, %v709
    %v711 = vpop.f32.mrf.mxu0
    %v712 = vadd.f32 0.0, %v711
    %713 = vdwg.mxu0
    %v714 = vadd.f32 %v185, %v639
    %v715 = vadd.f32 %v187, %v641
    %v716 = vadd.f32 %v298, %v710
    %v717 = vadd.f32 %v300, %v712
    %v718 = vxor.u32 %v714, 2147483648
    %v719 = vmul.f32 %v718, 1.442695
    %v720 = vpow.pop %v719
    %v721 = vadd.f32 %v720, 1.0
    %v722 = vrcp.pop %v721
    %v723 = vmul.f32 1.0, %v722
    %v724 = vxor.u32 %v715, 2147483648
    %v725 = vmul.f32 %v724, 1.442695
    %v726 = vpow.pop %v725
    %v727 = vadd.f32 %v726, 1.0
    %v728 = vrcp.pop %v727
    %v729 = vmul.f32 1.0, %v728
    %v730 = vtanh.pop %v716
    %v731 = vxor.u32 %v717, 2147483648
    %v732 = vmul.f32 %v731, 1.442695
    %v733 = vpow.pop %v732
    %v734 = vadd.f32 %v733, 1.0
    %v735 = vrcp.pop %v734
    %v736 = vmul.f32 1.0, %v735
    %v737 = vmul.f32 %v729, %v569
    %v738 = vmul.f32 %v723, %v730
    %v739 = vadd.f32 %v737, %v738
    %v740 = vtanh.pop %v739
    %v741 = vmul.f32 %v736, %v740
    %742 = vmatprep.subr.mxu0 %v399
    %743 = vmatpush1.msra.mxu0 %v398
    %744 = vmatprep.subr.mxu0 %v395
    %745 = vmatpush1.msra.mxu0 %v394
    %746 = vmatprep.subr.mxu0 %v391
    %747 = vmatpush1.msra.mxu0 %v390
    %748 = vmatprep.subr.mxu0 %v387
    %749 = vmatpush1.msra.mxu0 %v386
    %750 = vmatprep.subr.mxu0 %v383
    %751 = vmatpush1.msra.mxu0 %v382
    %752 = vmatprep.subr.mxu0 %v379
    %753 = vmatpush1.msra.mxu0 %v378
    %754 = vmatprep.subr.mxu0 %v375
    %755 = vmatpush1.msra.mxu0 %v374
    %756 = vmatprep.subr.mxu0 %v371
    %757 = vmatpush1.msra.mxu0 %v370
    %758 = vmatprep.subr.mxu0 %v367
    %759 = vmatpush1.msra.mxu0 %v366
    %760 = vmatprep.subr.mxu0 %v363
    %761 = vmatpush1.msra.mxu0 %v362
    %762 = vmatprep.subr.mxu0 %v359
    %763 = vmatpush1.msra.mxu0 %v358
    %764 = vmatprep.subr.mxu0 %v355
    %765 = vmatpush1.msra.mxu0 %v354
    %766 = vmatprep.subr.mxu0 %v351
    %767 = vmatpush1.msra.mxu0 %v350
    %768 = vmatprep.subr.mxu0 %v347
    %769 = vmatpush1.msra.mxu0 %v346
    %770 = vmatprep.subr.mxu0 %v343
    %771 = vmatpush1.msra.mxu0 %v342
    %772 = vmatprep.subr.mxu0 %v339
    %773 = vmatpush1.msra.mxu0 %v338
    %774 = vmatprep.subr.mxu0 0.0
    %775 = vmatpush2.msra.mxu0 0.0
    %776 = vmatprep.subr.mxu0 0.0
    %777 = vmatpush2.msra.mxu0 0.0
    %778 = vmatprep.subr.mxu0 0.0
    %779 = vmatpush2.msra.mxu0 0.0
    %780 = vmatprep.subr.mxu0 0.0
    %781 = vmatpush2.msra.mxu0 0.0
    %782 = vmatprep.subr.mxu0 0.0
    %783 = vmatpush2.msra.mxu0 0.0
    %784 = vmatprep.subr.mxu0 0.0
    %785 = vmatpush2.msra.mxu0 0.0
    %786 = vmatprep.subr.mxu0 0.0
    %787 = vmatpush2.msra.mxu0 0.0
    %788 = vmatprep.subr.mxu0 0.0
    %789 = vmatpush2.msra.mxu0 0.0
    %790 = vmatprep.subr.mxu0 0.0
    %791 = vmatpush2.msra.mxu0 0.0
    %792 = vmatprep.subr.mxu0 0.0
    %793 = vmatpush2.msra.mxu0 0.0
    %794 = vmatprep.subr.mxu0 0.0
    %795 = vmatpush2.msra.mxu0 0.0
    %796 = vmatprep.subr.mxu0 0.0
    %797 = vmatpush2.msra.mxu0 0.0
    %798 = vmatprep.subr.mxu0 0.0
    %799 = vmatpush2.msra.mxu0 0.0
    %800 = vmatprep.subr.mxu0 0.0
    %801 = vmatpush2.msra.mxu0 0.0
    %802 = vmatprep.subr.mxu0 0.0
    %803 = vmatpush2.msra.mxu0 0.0
    %804 = vmatprep.subr.mxu0 0.0
    %805 = vmatpush2.msra.mxu0 0.0
    %806 = vmatprep.mubr.f32.mxu0 0.0
    %807 = vmatmul.mubr.f32.gmra.mxu0 %v741
    %v808 = vpop.f32.mrf.mxu0
    %v809 = vadd.f32 0.0, %v808
    %v810 = vpop.f32.mrf.mxu0
    %v811 = vadd.f32 0.0, %v810
    %812 = vdwg.mxu0
    %813 = vmatprep.subr.mxu0 %v401
    %814 = vmatpush1.msra.mxu0 %v400
    %815 = vmatprep.subr.mxu0 %v397
    %816 = vmatpush1.msra.mxu0 %v396
    %817 = vmatprep.subr.mxu0 %v393
    %818 = vmatpush1.msra.mxu0 %v392
    %819 = vmatprep.subr.mxu0 %v389
    %820 = vmatpush1.msra.mxu0 %v388
    %821 = vmatprep.subr.mxu0 %v385
    %822 = vmatpush1.msra.mxu0 %v384
    %823 = vmatprep.subr.mxu0 %v381
    %824 = vmatpush1.msra.mxu0 %v380
    %825 = vmatprep.subr.mxu0 %v377
    %826 = vmatpush1.msra.mxu0 %v376
    %827 = vmatprep.subr.mxu0 %v373
    %828 = vmatpush1.msra.mxu0 %v372
    %829 = vmatprep.subr.mxu0 %v369
    %830 = vmatpush1.msra.mxu0 %v368
    %831 = vmatprep.subr.mxu0 %v365
    %832 = vmatpush1.msra.mxu0 %v364
    %833 = vmatprep.subr.mxu0 %v361
    %834 = vmatpush1.msra.mxu0 %v360
    %835 = vmatprep.subr.mxu0 %v357
    %836 = vmatpush1.msra.mxu0 %v356
    %837 = vmatprep.subr.mxu0 %v353
    %838 = vmatpush1.msra.mxu0 %v352
    %839 = vmatprep.subr.mxu0 %v349
    %840 = vmatpush1.msra.mxu0 %v348
    %841 = vmatprep.subr.mxu0 %v345
    %842 = vmatpush1.msra.mxu0 %v344
    %843 = vmatprep.subr.mxu0 %v341
    %844 = vmatpush1.msra.mxu0 %v340
    %845 = vmatprep.subr.mxu0 0.0
    %846 = vmatpush2.msra.mxu0 0.0
    %847 = vmatprep.subr.mxu0 0.0
    %848 = vmatpush2.msra.mxu0 0.0
    %849 = vmatprep.subr.mxu0 0.0
    %850 = vmatpush2.msra.mxu0 0.0
    %851 = vmatprep.subr.mxu0 0.0
    %852 = vmatpush2.msra.mxu0 0.0
    %853 = vmatprep.subr.mxu0 0.0
    %854 = vmatpush2.msra.mxu0 0.0
    %855 = vmatprep.subr.mxu0 0.0
    %856 = vmatpush2.msra.mxu0 0.0
    %857 = vmatprep.subr.mxu0 0.0
    %858 = vmatpush2.msra.mxu0 0.0
    %859 = vmatprep.subr.mxu0 0.0
    %860 = vmatpush2.msra.mxu0 0.0
    %861 = vmatprep.subr.mxu0 0.0
    %862 = vmatpush2.msra.mxu0 0.0
    %863 = vmatprep.subr.mxu0 0.0
    %864 = vmatpush2.msra.mxu0 0.0
    %865 = vmatprep.subr.mxu0 0.0
    %866 = vmatpush2.msra.mxu0 0.0
    %867 = vmatprep.subr.mxu0 0.0
    %868 = vmatpush2.msra.mxu0 0.0
    %869 = vmatprep.subr.mxu0 0.0
    %870 = vmatpush2.msra.mxu0 0.0
    %871 = vmatprep.subr.mxu0 0.0
    %872 = vmatpush2.msra.mxu0 0.0
    %873 = vmatprep.subr.mxu0 0.0
    %874 = vmatpush2.msra.mxu0 0.0
    %875 = vmatprep.subr.mxu0 0.0
    %876 = vmatpush2.msra.mxu0 0.0
    %877 = vmatprep.mubr.f32.mxu0 0.0
    %878 = vmatmul.mubr.f32.gmra.mxu0 %v741
    %v879 = vpop.f32.mrf.mxu0
    %v880 = vadd.f32 0.0, %v879
    %v881 = vpop.f32.mrf.mxu0
    %v882 = vadd.f32 0.0, %v881
    %883 = vdwg.mxu0
    %v884 = vadd.f32 %v191, %v809
    %v885 = vadd.f32 %v193, %v811
    %v886 = vadd.f32 %v304, %v880
    %v887 = vadd.f32 %v306, %v882
    %v888 = vxor.u32 %v884, 2147483648
    %v889 = vmul.f32 %v888, 1.442695
    %v890 = vpow.pop %v889
    %v891 = vadd.f32 %v890, 1.0
    %v892 = vrcp.pop %v891
    %v893 = vmul.f32 1.0, %v892
    %v894 = vxor.u32 %v885, 2147483648
    %v895 = vmul.f32 %v894, 1.442695
    %v896 = vpow.pop %v895
    %v897 = vadd.f32 %v896, 1.0
    %v898 = vrcp.pop %v897
    %v899 = vmul.f32 1.0, %v898
    %v900 = vtanh.pop %v886
    %v901 = vxor.u32 %v887, 2147483648
    %v902 = vmul.f32 %v901, 1.442695
    %v903 = vpow.pop %v902
    %v904 = vadd.f32 %v903, 1.0
    %v905 = vrcp.pop %v904
    %v906 = vmul.f32 1.0, %v905
    %v907 = vmul.f32 %v899, %v739
    %v908 = vmul.f32 %v893, %v900
    %v909 = vadd.f32 %v907, %v908
    %v910 = vtanh.pop %v909
    %v911 = vmul.f32 %v906, %v910
    %912 = vmatprep.subr.mxu0 %v399
    %913 = vmatpush1.msra.mxu0 %v398
    %914 = vmatprep.subr.mxu0 %v395
    %915 = vmatpush1.msra.mxu0 %v394
    %916 = vmatprep.subr.mxu0 %v391
    %917 = vmatpush1.msra.mxu0 %v390
    %918 = vmatprep.subr.mxu0 %v387
    %919 = vmatpush1.msra.mxu0 %v386
    %920 = vmatprep.subr.mxu0 %v383
    %921 = vmatpush1.msra.mxu0 %v382
    %922 = vmatprep.subr.mxu0 %v379
    %923 = vmatpush1.msra.mxu0 %v378
    %924 = vmatprep.subr.mxu0 %v375
    %925 = vmatpush1.msra.mxu0 %v374
    %926 = vmatprep.subr.mxu0 %v371
    %927 = vmatpush1.msra.mxu0 %v370
    %928 = vmatprep.subr.mxu0 %v367
    %929 = vmatpush1.msra.mxu0 %v366
    %930 = vmatprep.subr.mxu0 %v363
    %931 = vmatpush1.msra.mxu0 %v362
    %932 = vmatprep.subr.mxu0 %v359
    %933 = vmatpush1.msra.mxu0 %v358
    %934 = vmatprep.subr.mxu0 %v355
    %935 = vmatpush1.msra.mxu0 %v354
    %936 = vmatprep.subr.mxu0 %v351
    %937 = vmatpush1.msra.mxu0 %v350
    %938 = vmatprep.subr.mxu0 %v347
    %939 = vmatpush1.msra.mxu0 %v346
    %940 = vmatprep.subr.mxu0 %v343
    %941 = vmatpush1.msra.mxu0 %v342
    %942 = vmatprep.subr.mxu0 %v339
    %943 = vmatpush1.msra.mxu0 %v338
    %944 = vmatprep.subr.mxu0 0.0
    %945 = vmatpush2.msra.mxu0 0.0
    %946 = vmatprep.subr.mxu0 0.0
    %947 = vmatpush2.msra.mxu0 0.0
    %948 = vmatprep.subr.mxu0 0.0
    %949 = vmatpush2.msra.mxu0 0.0
    %950 = vmatprep.subr.mxu0 0.0
    %951 = vmatpush2.msra.mxu0 0.0
    %952 = vmatprep.subr.mxu0 0.0
    %953 = vmatpush2.msra.mxu0 0.0
    %954 = vmatprep.subr.mxu0 0.0
    %955 = vmatpush2.msra.mxu0 0.0
    %956 = vmatprep.subr.mxu0 0.0
    %957 = vmatpush2.msra.mxu0 0.0
    %958 = vmatprep.subr.mxu0 0.0
    %959 = vmatpush2.msra.mxu0 0.0
    %960 = vmatprep.subr.mxu0 0.0
    %961 = vmatpush2.msra.mxu0 0.0
    %962 = vmatprep.subr.mxu0 0.0
    %963 = vmatpush2.msra.mxu0 0.0
    %964 = vmatprep.subr.mxu0 0.0
    %965 = vmatpush2.msra.mxu0 0.0
    %966 = vmatprep.subr.mxu0 0.0
    %967 = vmatpush2.msra.mxu0 0.0
    %968 = vmatprep.subr.mxu0 0.0
    %969 = vmatpush2.msra.mxu0 0.0
    %970 = vmatprep.subr.mxu0 0.0
    %971 = vmatpush2.msra.mxu0 0.0
    %972 = vmatprep.subr.mxu0 0.0
    %973 = vmatpush2.msra.mxu0 0.0
    %974 = vmatprep.subr.mxu0 0.0
    %975 = vmatpush2.msra.mxu0 0.0
    %976 = vmatprep.mubr.f32.mxu0 0.0
    %977 = vmatmul.mubr.f32.gmra.mxu0 %v911
    %v978 = vpop.f32.mrf.mxu0
    %v979 = vadd.f32 0.0, %v978
    %v980 = vpop.f32.mrf.mxu0
    %v981 = vadd.f32 0.0, %v980
    %982 = vdwg.mxu0
    %983 = vmatprep.subr.mxu0 %v401
    %984 = vmatpush1.msra.mxu0 %v400
    %985 = vmatprep.subr.mxu0 %v397
    %986 = vmatpush1.msra.mxu0 %v396
    %987 = vmatprep.subr.mxu0 %v393
    %988 = vmatpush1.msra.mxu0 %v392
    %989 = vmatprep.subr.mxu0 %v389
    %990 = vmatpush1.msra.mxu0 %v388
    %991 = vmatprep.subr.mxu0 %v385
    %992 = vmatpush1.msra.mxu0 %v384
    %993 = vmatprep.subr.mxu0 %v381
    %994 = vmatpush1.msra.mxu0 %v380
    %995 = vmatprep.subr.mxu0 %v377
    %996 = vmatpush1.msra.mxu0 %v376
    %997 = vmatprep.subr.mxu0 %v373
    %998 = vmatpush1.msra.mxu0 %v372
    %999 = vmatprep.subr.mxu0 %v369
    %1000 = vmatpush1.msra.mxu0 %v368
    %1001 = vmatprep.subr.mxu0 %v365
    %1002 = vmatpush1.msra.mxu0 %v364
    %1003 = vmatprep.subr.mxu0 %v361
    %1004 = vmatpush1.msra.mxu0 %v360
    %1005 = vmatprep.subr.mxu0 %v357
    %1006 = vmatpush1.msra.mxu0 %v356
    %1007 = vmatprep.subr.mxu0 %v353
    %1008 = vmatpush1.msra.mxu0 %v352
    %1009 = vmatprep.subr.mxu0 %v349
    %1010 = vmatpush1.msra.mxu0 %v348
    %1011 = vmatprep.subr.mxu0 %v345
    %1012 = vmatpush1.msra.mxu0 %v344
    %1013 = vmatprep.subr.mxu0 %v341
    %1014 = vmatpush1.msra.mxu0 %v340
    %1015 = vmatprep.subr.mxu0 0.0
    %1016 = vmatpush2.msra.mxu0 0.0
    %1017 = vmatprep.subr.mxu0 0.0
    %1018 = vmatpush2.msra.mxu0 0.0
    %1019 = vmatprep.subr.mxu0 0.0
    %1020 = vmatpush2.msra.mxu0 0.0
    %1021 = vmatprep.subr.mxu0 0.0
    %1022 = vmatpush2.msra.mxu0 0.0
    %1023 = vmatprep.subr.mxu0 0.0
    %1024 = vmatpush2.msra.mxu0 0.0
    %1025 = vmatprep.subr.mxu0 0.0
    %1026 = vmatpush2.msra.mxu0 0.0
    %1027 = vmatprep.subr.mxu0 0.0
    %1028 = vmatpush2.msra.mxu0 0.0
    %1029 = vmatprep.subr.mxu0 0.0
    %1030 = vmatpush2.msra.mxu0 0.0
    %1031 = vmatprep.subr.mxu0 0.0
    %1032 = vmatpush2.msra.mxu0 0.0
    %1033 = vmatprep.subr.mxu0 0.0
    %1034 = vmatpush2.msra.mxu0 0.0
    %1035 = vmatprep.subr.mxu0 0.0
    %1036 = vmatpush2.msra.mxu0 0.0
    %1037 = vmatprep.subr.mxu0 0.0
    %1038 = vmatpush2.msra.mxu0 0.0
    %1039 = vmatprep.subr.mxu0 0.0
    %1040 = vmatpush2.msra.mxu0 0.0
    %1041 = vmatprep.subr.mxu0 0.0
    %1042 = vmatpush2.msra.mxu0 0.0
    %1043 = vmatprep.subr.mxu0 0.0
    %1044 = vmatpush2.msra.mxu0 0.0
    %1045 = vmatprep.subr.mxu0 0.0
    %1046 = vmatpush2.msra.mxu0 0.0
    %1047 = vmatprep.mubr.f32.mxu0 0.0
    %1048 = vmatmul.mubr.f32.gmra.mxu0 %v911
    %v1049 = vpop.f32.mrf.mxu0
    %v1050 = vadd.f32 0.0, %v1049
    %v1051 = vpop.f32.mrf.mxu0
    %v1052 = vadd.f32 0.0, %v1051
    %1053 = vdwg.mxu0
    %v1054 = vadd.f32 %v197, %v979
    %v1055 = vadd.f32 %v199, %v981
    %v1056 = vadd.f32 %v310, %v1050
    %v1057 = vadd.f32 %v312, %v1052
    %v1058 = vxor.u32 %v1054, 2147483648
    %v1059 = vmul.f32 %v1058, 1.442695
    %v1060 = vpow.pop %v1059
    %v1061 = vadd.f32 %v1060, 1.0
    %v1062 = vrcp.pop %v1061
    %v1063 = vmul.f32 1.0, %v1062
    %v1064 = vxor.u32 %v1055, 2147483648
    %v1065 = vmul.f32 %v1064, 1.442695
    %v1066 = vpow.pop %v1065
    %v1067 = vadd.f32 %v1066, 1.0
    %v1068 = vrcp.pop %v1067
    %v1069 = vmul.f32 1.0, %v1068
    %v1070 = vtanh.pop %v1056
    %v1071 = vxor.u32 %v1057, 2147483648
    %v1072 = vmul.f32 %v1071, 1.442695
    %v1073 = vpow.pop %v1072
    %v1074 = vadd.f32 %v1073, 1.0
    %v1075 = vrcp.pop %v1074
    %v1076 = vmul.f32 1.0, %v1075
    %v1077 = vmul.f32 %v1069, %v909
    %v1078 = vmul.f32 %v1063, %v1070
    %v1079 = vadd.f32 %v1077, %v1078
    %v1080 = vtanh.pop %v1079
    %v1081 = vmul.f32 %v1076, %v1080
    %1082 = vmatprep.subr.mxu0 %v399
    %1083 = vmatpush1.msra.mxu0 %v398
    %1084 = vmatprep.subr.mxu0 %v395
    %1085 = vmatpush1.msra.mxu0 %v394
    %1086 = vmatprep.subr.mxu0 %v391
    %1087 = vmatpush1.msra.mxu0 %v390
    %1088 = vmatprep.subr.mxu0 %v387
    %1089 = vmatpush1.msra.mxu0 %v386
    %1090 = vmatprep.subr.mxu0 %v383
    %1091 = vmatpush1.msra.mxu0 %v382
    %1092 = vmatprep.subr.mxu0 %v379
    %1093 = vmatpush1.msra.mxu0 %v378
    %1094 = vmatprep.subr.mxu0 %v375
    %1095 = vmatpush1.msra.mxu0 %v374
    %1096 = vmatprep.subr.mxu0 %v371
    %1097 = vmatpush1.msra.mxu0 %v370
    %1098 = vmatprep.subr.mxu0 %v367
    %1099 = vmatpush1.msra.mxu0 %v366
    %1100 = vmatprep.subr.mxu0 %v363
    %1101 = vmatpush1.msra.mxu0 %v362
    %1102 = vmatprep.subr.mxu0 %v359
    %1103 = vmatpush1.msra.mxu0 %v358
    %1104 = vmatprep.subr.mxu0 %v355
    %1105 = vmatpush1.msra.mxu0 %v354
    %1106 = vmatprep.subr.mxu0 %v351
    %1107 = vmatpush1.msra.mxu0 %v350
    %1108 = vmatprep.subr.mxu0 %v347
    %1109 = vmatpush1.msra.mxu0 %v346
    %1110 = vmatprep.subr.mxu0 %v343
    %1111 = vmatpush1.msra.mxu0 %v342
    %1112 = vmatprep.subr.mxu0 %v339
    %1113 = vmatpush1.msra.mxu0 %v338
    %1114 = vmatprep.subr.mxu0 0.0
    %1115 = vmatpush2.msra.mxu0 0.0
    %1116 = vmatprep.subr.mxu0 0.0
    %1117 = vmatpush2.msra.mxu0 0.0
    %1118 = vmatprep.subr.mxu0 0.0
    %1119 = vmatpush2.msra.mxu0 0.0
    %1120 = vmatprep.subr.mxu0 0.0
    %1121 = vmatpush2.msra.mxu0 0.0
    %1122 = vmatprep.subr.mxu0 0.0
    %1123 = vmatpush2.msra.mxu0 0.0
    %1124 = vmatprep.subr.mxu0 0.0
    %1125 = vmatpush2.msra.mxu0 0.0
    %1126 = vmatprep.subr.mxu0 0.0
    %1127 = vmatpush2.msra.mxu0 0.0
    %1128 = vmatprep.subr.mxu0 0.0
    %1129 = vmatpush2.msra.mxu0 0.0
    %1130 = vmatprep.subr.mxu0 0.0
    %1131 = vmatpush2.msra.mxu0 0.0
    %1132 = vmatprep.subr.mxu0 0.0
    %1133 = vmatpush2.msra.mxu0 0.0
    %1134 = vmatprep.subr.mxu0 0.0
    %1135 = vmatpush2.msra.mxu0 0.0
    %1136 = vmatprep.subr.mxu0 0.0
    %1137 = vmatpush2.msra.mxu0 0.0
    %1138 = vmatprep.subr.mxu0 0.0
    %1139 = vmatpush2.msra.mxu0 0.0
    %1140 = vmatprep.subr.mxu0 0.0
    %1141 = vmatpush2.msra.mxu0 0.0
    %1142 = vmatprep.subr.mxu0 0.0
    %1143 = vmatpush2.msra.mxu0 0.0
    %1144 = vmatprep.subr.mxu0 0.0
    %1145 = vmatpush2.msra.mxu0 0.0
    %1146 = vmatprep.mubr.f32.mxu0 0.0
    %1147 = vmatmul.mubr.f32.gmra.mxu0 %v1081
    %v1148 = vpop.f32.mrf.mxu0
    %v1149 = vadd.f32 0.0, %v1148
    %v1150 = vpop.f32.mrf.mxu0
    %v1151 = vadd.f32 0.0, %v1150
    %1152 = vdwg.mxu0
    %1153 = vmatprep.subr.mxu0 %v401
    %1154 = vmatpush1.msra.mxu0 %v400
    %1155 = vmatprep.subr.mxu0 %v397
    %1156 = vmatpush1.msra.mxu0 %v396
    %1157 = vmatprep.subr.mxu0 %v393
    %1158 = vmatpush1.msra.mxu0 %v392
    %1159 = vmatprep.subr.mxu0 %v389
    %1160 = vmatpush1.msra.mxu0 %v388
    %1161 = vmatprep.subr.mxu0 %v385
    %1162 = vmatpush1.msra.mxu0 %v384
    %1163 = vmatprep.subr.mxu0 %v381
    %1164 = vmatpush1.msra.mxu0 %v380
    %1165 = vmatprep.subr.mxu0 %v377
    %1166 = vmatpush1.msra.mxu0 %v376
    %1167 = vmatprep.subr.mxu0 %v373
    %1168 = vmatpush1.msra.mxu0 %v372
    %1169 = vmatprep.subr.mxu0 %v369
    %1170 = vmatpush1.msra.mxu0 %v368
    %1171 = vmatprep.subr.mxu0 %v365
    %1172 = vmatpush1.msra.mxu0 %v364
    %1173 = vmatprep.subr.mxu0 %v361
    %1174 = vmatpush1.msra.mxu0 %v360
    %1175 = vmatprep.subr.mxu0 %v357
    %1176 = vmatpush1.msra.mxu0 %v356
    %1177 = vmatprep.subr.mxu0 %v353
    %1178 = vmatpush1.msra.mxu0 %v352
    %1179 = vmatprep.subr.mxu0 %v349
    %1180 = vmatpush1.msra.mxu0 %v348
    %1181 = vmatprep.subr.mxu0 %v345
    %1182 = vmatpush1.msra.mxu0 %v344
    %1183 = vmatprep.subr.mxu0 %v341
    %1184 = vmatpush1.msra.mxu0 %v340
    %1185 = vmatprep.subr.mxu0 0.0
    %1186 = vmatpush2.msra.mxu0 0.0
    %1187 = vmatprep.subr.mxu0 0.0
    %1188 = vmatpush2.msra.mxu0 0.0
    %1189 = vmatprep.subr.mxu0 0.0
    %1190 = vmatpush2.msra.mxu0 0.0
    %1191 = vmatprep.subr.mxu0 0.0
    %1192 = vmatpush2.msra.mxu0 0.0
    %1193 = vmatprep.subr.mxu0 0.0
    %1194 = vmatpush2.msra.mxu0 0.0
    %1195 = vmatprep.subr.mxu0 0.0
    %1196 = vmatpush2.msra.mxu0 0.0
    %1197 = vmatprep.subr.mxu0 0.0
    %1198 = vmatpush2.msra.mxu0 0.0
    %1199 = vmatprep.subr.mxu0 0.0
    %1200 = vmatpush2.msra.mxu0 0.0
    %1201 = vmatprep.subr.mxu0 0.0
    %1202 = vmatpush2.msra.mxu0 0.0
    %1203 = vmatprep.subr.mxu0 0.0
    %1204 = vmatpush2.msra.mxu0 0.0
    %1205 = vmatprep.subr.mxu0 0.0
    %1206 = vmatpush2.msra.mxu0 0.0
    %1207 = vmatprep.subr.mxu0 0.0
    %1208 = vmatpush2.msra.mxu0 0.0
    %1209 = vmatprep.subr.mxu0 0.0
    %1210 = vmatpush2.msra.mxu0 0.0
    %1211 = vmatprep.subr.mxu0 0.0
    %1212 = vmatpush2.msra.mxu0 0.0
    %1213 = vmatprep.subr.mxu0 0.0
    %1214 = vmatpush2.msra.mxu0 0.0
    %1215 = vmatprep.subr.mxu0 0.0
    %1216 = vmatpush2.msra.mxu0 0.0
    %1217 = vmatprep.mubr.f32.mxu0 0.0
    %1218 = vmatmul.mubr.f32.gmra.mxu0 %v1081
    %v1219 = vpop.f32.mrf.mxu0
    %v1220 = vadd.f32 0.0, %v1219
    %v1221 = vpop.f32.mrf.mxu0
    %v1222 = vadd.f32 0.0, %v1221
    %1223 = vdwg.mxu0
    %v1224 = vadd.f32 %v203, %v1149
    %v1225 = vadd.f32 %v205, %v1151
    %v1226 = vadd.f32 %v316, %v1220
    %v1227 = vadd.f32 %v318, %v1222
    %v1228 = vxor.u32 %v1224, 2147483648
    %v1229 = vmul.f32 %v1228, 1.442695
    %v1230 = vpow.pop %v1229
    %v1231 = vadd.f32 %v1230, 1.0
    %v1232 = vrcp.pop %v1231
    %v1233 = vmul.f32 1.0, %v1232
    %v1234 = vxor.u32 %v1225, 2147483648
    %v1235 = vmul.f32 %v1234, 1.442695
    %v1236 = vpow.pop %v1235
    %v1237 = vadd.f32 %v1236, 1.0
    %v1238 = vrcp.pop %v1237
    %v1239 = vmul.f32 1.0, %v1238
    %v1240 = vtanh.pop %v1226
    %v1241 = vxor.u32 %v1227, 2147483648
    %v1242 = vmul.f32 %v1241, 1.442695
    %v1243 = vpow.pop %v1242
    %v1244 = vadd.f32 %v1243, 1.0
    %v1245 = vrcp.pop %v1244
    %v1246 = vmul.f32 1.0, %v1245
    %v1247 = vmul.f32 %v1239, %v1079
    %v1248 = vmul.f32 %v1233, %v1240
    %v1249 = vadd.f32 %v1247, %v1248
    %v1250 = vtanh.pop %v1249
    %v1251 = vmul.f32 %v1246, %v1250
    %1252 = vmatprep.subr.mxu0 %v399
    %1253 = vmatpush1.msra.mxu0 %v398
    %1254 = vmatprep.subr.mxu0 %v395
    %1255 = vmatpush1.msra.mxu0 %v394
    %1256 = vmatprep.subr.mxu0 %v391
    %1257 = vmatpush1.msra.mxu0 %v390
    %1258 = vmatprep.subr.mxu0 %v387
    %1259 = vmatpush1.msra.mxu0 %v386
    %1260 = vmatprep.subr.mxu0 %v383
    %1261 = vmatpush1.msra.mxu0 %v382
    %1262 = vmatprep.subr.mxu0 %v379
    %1263 = vmatpush1.msra.mxu0 %v378
    %1264 = vmatprep.subr.mxu0 %v375
    %1265 = vmatpush1.msra.mxu0 %v374
    %1266 = vmatprep.subr.mxu0 %v371
    %1267 = vmatpush1.msra.mxu0 %v370
    %1268 = vmatprep.subr.mxu0 %v367
    %1269 = vmatpush1.msra.mxu0 %v366
    %1270 = vmatprep.subr.mxu0 %v363
    %1271 = vmatpush1.msra.mxu0 %v362
    %1272 = vmatprep.subr.mxu0 %v359
    %1273 = vmatpush1.msra.mxu0 %v358
    %1274 = vmatprep.subr.mxu0 %v355
    %1275 = vmatpush1.msra.mxu0 %v354
    %1276 = vmatprep.subr.mxu0 %v351
    %1277 = vmatpush1.msra.mxu0 %v350
    %1278 = vmatprep.subr.mxu0 %v347
    %1279 = vmatpush1.msra.mxu0 %v346
    %1280 = vmatprep.subr.mxu0 %v343
    %1281 = vmatpush1.msra.mxu0 %v342
    %1282 = vmatprep.subr.mxu0 %v339
    %1283 = vmatpush1.msra.mxu0 %v338
    %1284 = vmatprep.subr.mxu0 0.0
    %1285 = vmatpush2.msra.mxu0 0.0
    %1286 = vmatprep.subr.mxu0 0.0
    %1287 = vmatpush2.msra.mxu0 0.0
    %1288 = vmatprep.subr.mxu0 0.0
    %1289 = vmatpush2.msra.mxu0 0.0
    %1290 = vmatprep.subr.mxu0 0.0
    %1291 = vmatpush2.msra.mxu0 0.0
    %1292 = vmatprep.subr.mxu0 0.0
    %1293 = vmatpush2.msra.mxu0 0.0
    %1294 = vmatprep.subr.mxu0 0.0
    %1295 = vmatpush2.msra.mxu0 0.0
    %1296 = vmatprep.subr.mxu0 0.0
    %1297 = vmatpush2.msra.mxu0 0.0
    %1298 = vmatprep.subr.mxu0 0.0
    %1299 = vmatpush2.msra.mxu0 0.0
    %1300 = vmatprep.subr.mxu0 0.0
    %1301 = vmatpush2.msra.mxu0 0.0
    %1302 = vmatprep.subr.mxu0 0.0
    %1303 = vmatpush2.msra.mxu0 0.0
    %1304 = vmatprep.subr.mxu0 0.0
    %1305 = vmatpush2.msra.mxu0 0.0
    %1306 = vmatprep.subr.mxu0 0.0
    %1307 = vmatpush2.msra.mxu0 0.0
    %1308 = vmatprep.subr.mxu0 0.0
    %1309 = vmatpush2.msra.mxu0 0.0
    %1310 = vmatprep.subr.mxu0 0.0
    %1311 = vmatpush2.msra.mxu0 0.0
    %1312 = vmatprep.subr.mxu0 0.0
    %1313 = vmatpush2.msra.mxu0 0.0
    %1314 = vmatprep.subr.mxu0 0.0
    %1315 = vmatpush2.msra.mxu0 0.0
    %1316 = vmatprep.mubr.f32.mxu0 0.0
    %1317 = vmatmul.mubr.f32.gmra.mxu0 %v1251
    %v1318 = vpop.f32.mrf.mxu0
    %v1319 = vadd.f32 0.0, %v1318
    %v1320 = vpop.f32.mrf.mxu0
    %v1321 = vadd.f32 0.0, %v1320
    %1322 = vdwg.mxu0
    %1323 = vmatprep.subr.mxu0 %v401
    %1324 = vmatpush1.msra.mxu0 %v400
    %1325 = vmatprep.subr.mxu0 %v397
    %1326 = vmatpush1.msra.mxu0 %v396
    %1327 = vmatprep.subr.mxu0 %v393
    %1328 = vmatpush1.msra.mxu0 %v392
    %1329 = vmatprep.subr.mxu0 %v389
    %1330 = vmatpush1.msra.mxu0 %v388
    %1331 = vmatprep.subr.mxu0 %v385
    %1332 = vmatpush1.msra.mxu0 %v384
    %1333 = vmatprep.subr.mxu0 %v381
    %1334 = vmatpush1.msra.mxu0 %v380
    %1335 = vmatprep.subr.mxu0 %v377
    %1336 = vmatpush1.msra.mxu0 %v376
    %1337 = vmatprep.subr.mxu0 %v373
    %1338 = vmatpush1.msra.mxu0 %v372
    %1339 = vmatprep.subr.mxu0 %v369
    %1340 = vmatpush1.msra.mxu0 %v368
    %1341 = vmatprep.subr.mxu0 %v365
    %1342 = vmatpush1.msra.mxu0 %v364
    %1343 = vmatprep.subr.mxu0 %v361
    %1344 = vmatpush1.msra.mxu0 %v360
    %1345 = vmatprep.subr.mxu0 %v357
    %1346 = vmatpush1.msra.mxu0 %v356
    %1347 = vmatprep.subr.mxu0 %v353
    %1348 = vmatpush1.msra.mxu0 %v352
    %1349 = vmatprep.subr.mxu0 %v349
    %1350 = vmatpush1.msra.mxu0 %v348
    %1351 = vmatprep.subr.mxu0 %v345
    %1352 = vmatpush1.msra.mxu0 %v344
    %1353 = vmatprep.subr.mxu0 %v341
    %1354 = vmatpush1.msra.mxu0 %v340
    %1355 = vmatprep.subr.mxu0 0.0
    %1356 = vmatpush2.msra.mxu0 0.0
    %1357 = vmatprep.subr.mxu0 0.0
    %1358 = vmatpush2.msra.mxu0 0.0
    %1359 = vmatprep.subr.mxu0 0.0
    %1360 = vmatpush2.msra.mxu0 0.0
    %1361 = vmatprep.subr.mxu0 0.0
    %1362 = vmatpush2.msra.mxu0 0.0
    %1363 = vmatprep.subr.mxu0 0.0
    %1364 = vmatpush2.msra.mxu0 0.0
    %1365 = vmatprep.subr.mxu0 0.0
    %1366 = vmatpush2.msra.mxu0 0.0
    %1367 = vmatprep.subr.mxu0 0.0
    %1368 = vmatpush2.msra.mxu0 0.0
    %1369 = vmatprep.subr.mxu0 0.0
    %1370 = vmatpush2.msra.mxu0 0.0
    %1371 = vmatprep.subr.mxu0 0.0
    %1372 = vmatpush2.msra.mxu0 0.0
    %1373 = vmatprep.subr.mxu0 0.0
    %1374 = vmatpush2.msra.mxu0 0.0
    %1375 = vmatprep.subr.mxu0 0.0
    %1376 = vmatpush2.msra.mxu0 0.0
    %1377 = vmatprep.subr.mxu0 0.0
    %1378 = vmatpush2.msra.mxu0 0.0
    %1379 = vmatprep.subr.mxu0 0.0
    %1380 = vmatpush2.msra.mxu0 0.0
    %1381 = vmatprep.subr.mxu0 0.0
    %1382 = vmatpush2.msra.mxu0 0.0
    %1383 = vmatprep.subr.mxu0 0.0
    %1384 = vmatpush2.msra.mxu0 0.0
    %1385 = vmatprep.subr.mxu0 0.0
    %1386 = vmatpush2.msra.mxu0 0.0
    %1387 = vmatprep.mubr.f32.mxu0 0.0
    %1388 = vmatmul.mubr.f32.gmra.mxu0 %v1251
    %v1389 = vpop.f32.mrf.mxu0
    %v1390 = vadd.f32 0.0, %v1389
    %v1391 = vpop.f32.mrf.mxu0
    %v1392 = vadd.f32 0.0, %v1391
    %1393 = vdwg.mxu0
    %v1394 = vadd.f32 %v209, %v1319
    %v1395 = vadd.f32 %v211, %v1321
    %v1396 = vadd.f32 %v322, %v1390
    %v1397 = vadd.f32 %v324, %v1392
    %v1398 = vxor.u32 %v1394, 2147483648
    %v1399 = vmul.f32 %v1398, 1.442695
    %v1400 = vpow.pop %v1399
    %v1401 = vadd.f32 %v1400, 1.0
    %v1402 = vrcp.pop %v1401
    %v1403 = vmul.f32 1.0, %v1402
    %v1404 = vxor.u32 %v1395, 2147483648
    %v1405 = vmul.f32 %v1404, 1.442695
    %v1406 = vpow.pop %v1405
    %v1407 = vadd.f32 %v1406, 1.0
    %v1408 = vrcp.pop %v1407
    %v1409 = vmul.f32 1.0, %v1408
    %v1410 = vtanh.pop %v1396
    %v1411 = vxor.u32 %v1397, 2147483648
    %v1412 = vmul.f32 %v1411, 1.442695
    %v1413 = vpow.pop %v1412
    %v1414 = vadd.f32 %v1413, 1.0
    %v1415 = vrcp.pop %v1414
    %v1416 = vmul.f32 1.0, %v1415
    %v1417 = vmul.f32 %v1409, %v1249
    %v1418 = vmul.f32 %v1403, %v1410
    %v1419 = vadd.f32 %v1417, %v1418
    %v1420 = vtanh.pop %v1419
    %v1421 = vmul.f32 %v1416, %v1420
    %1422 = vmatprep.subr.mxu0 %v399
    %1423 = vmatpush1.msra.mxu0 %v398
    %1424 = vmatprep.subr.mxu0 %v395
    %1425 = vmatpush1.msra.mxu0 %v394
    %1426 = vmatprep.subr.mxu0 %v391
    %1427 = vmatpush1.msra.mxu0 %v390
    %1428 = vmatprep.subr.mxu0 %v387
    %1429 = vmatpush1.msra.mxu0 %v386
    %1430 = vmatprep.subr.mxu0 %v383
    %1431 = vmatpush1.msra.mxu0 %v382
    %1432 = vmatprep.subr.mxu0 %v379
    %1433 = vmatpush1.msra.mxu0 %v378
    %1434 = vmatprep.subr.mxu0 %v375
    %1435 = vmatpush1.msra.mxu0 %v374
    %1436 = vmatprep.subr.mxu0 %v371
    %1437 = vmatpush1.msra.mxu0 %v370
    %1438 = vmatprep.subr.mxu0 %v367
    %1439 = vmatpush1.msra.mxu0 %v366
    %1440 = vmatprep.subr.mxu0 %v363
    %1441 = vmatpush1.msra.mxu0 %v362
    %1442 = vmatprep.subr.mxu0 %v359
    %1443 = vmatpush1.msra.mxu0 %v358
    %1444 = vmatprep.subr.mxu0 %v355
    %1445 = vmatpush1.msra.mxu0 %v354
    %1446 = vmatprep.subr.mxu0 %v351
    %1447 = vmatpush1.msra.mxu0 %v350
    %1448 = vmatprep.subr.mxu0 %v347
    %1449 = vmatpush1.msra.mxu0 %v346
    %1450 = vmatprep.subr.mxu0 %v343
    %1451 = vmatpush1.msra.mxu0 %v342
    %1452 = vmatprep.subr.mxu0 %v339
    %1453 = vmatpush1.msra.mxu0 %v338
    %1454 = vmatprep.subr.mxu0 0.0
    %1455 = vmatpush2.msra.mxu0 0.0
    %1456 = vmatprep.subr.mxu0 0.0
    %1457 = vmatpush2.msra.mxu0 0.0
    %1458 = vmatprep.subr.mxu0 0.0
    %1459 = vmatpush2.msra.mxu0 0.0
    %1460 = vmatprep.subr.mxu0 0.0
    %1461 = vmatpush2.msra.mxu0 0.0
    %1462 = vmatprep.subr.mxu0 0.0
    %1463 = vmatpush2.msra.mxu0 0.0
    %1464 = vmatprep.subr.mxu0 0.0
    %1465 = vmatpush2.msra.mxu0 0.0
    %1466 = vmatprep.subr.mxu0 0.0
    %1467 = vmatpush2.msra.mxu0 0.0
    %1468 = vmatprep.subr.mxu0 0.0
    %1469 = vmatpush2.msra.mxu0 0.0
    %1470 = vmatprep.subr.mxu0 0.0
    %1471 = vmatpush2.msra.mxu0 0.0
    %1472 = vmatprep.subr.mxu0 0.0
    %1473 = vmatpush2.msra.mxu0 0.0
    %1474 = vmatprep.subr.mxu0 0.0
    %1475 = vmatpush2.msra.mxu0 0.0
    %1476 = vmatprep.subr.mxu0 0.0
    %1477 = vmatpush2.msra.mxu0 0.0
    %1478 = vmatprep.subr.mxu0 0.0
    %1479 = vmatpush2.msra.mxu0 0.0
    %1480 = vmatprep.subr.mxu0 0.0
    %1481 = vmatpush2.msra.mxu0 0.0
    %1482 = vmatprep.subr.mxu0 0.0
    %1483 = vmatpush2.msra.mxu0 0.0
    %1484 = vmatprep.subr.mxu0 0.0
    %1485 = vmatpush2.msra.mxu0 0.0
    %1486 = vmatprep.mubr.f32.mxu0 0.0
    %1487 = vmatmul.mubr.f32.gmra.mxu0 %v1421
    %v1488 = vpop.f32.mrf.mxu0
    %v1489 = vadd.f32 0.0, %v1488
    %v1490 = vpop.f32.mrf.mxu0
    %v1491 = vadd.f32 0.0, %v1490
    %1492 = vdwg.mxu0
    %1493 = vmatprep.subr.mxu0 %v401
    %1494 = vmatpush1.msra.mxu0 %v400
    %1495 = vmatprep.subr.mxu0 %v397
    %1496 = vmatpush1.msra.mxu0 %v396
    %1497 = vmatprep.subr.mxu0 %v393
    %1498 = vmatpush1.msra.mxu0 %v392
    %1499 = vmatprep.subr.mxu0 %v389
    %1500 = vmatpush1.msra.mxu0 %v388
    %1501 = vmatprep.subr.mxu0 %v385
    %1502 = vmatpush1.msra.mxu0 %v384
    %1503 = vmatprep.subr.mxu0 %v381
    %1504 = vmatpush1.msra.mxu0 %v380
    %1505 = vmatprep.subr.mxu0 %v377
    %1506 = vmatpush1.msra.mxu0 %v376
    %1507 = vmatprep.subr.mxu0 %v373
    %1508 = vmatpush1.msra.mxu0 %v372
    %1509 = vmatprep.subr.mxu0 %v369
    %1510 = vmatpush1.msra.mxu0 %v368
    %1511 = vmatprep.subr.mxu0 %v365
    %1512 = vmatpush1.msra.mxu0 %v364
    %1513 = vmatprep.subr.mxu0 %v361
    %1514 = vmatpush1.msra.mxu0 %v360
    %1515 = vmatprep.subr.mxu0 %v357
    %1516 = vmatpush1.msra.mxu0 %v356
    %1517 = vmatprep.subr.mxu0 %v353
    %1518 = vmatpush1.msra.mxu0 %v352
    %1519 = vmatprep.subr.mxu0 %v349
    %1520 = vmatpush1.msra.mxu0 %v348
    %1521 = vmatprep.subr.mxu0 %v345
    %1522 = vmatpush1.msra.mxu0 %v344
    %1523 = vmatprep.subr.mxu0 %v341
    %1524 = vmatpush1.msra.mxu0 %v340
    %1525 = vmatprep.subr.mxu0 0.0
    %1526 = vmatpush2.msra.mxu0 0.0
    %1527 = vmatprep.subr.mxu0 0.0
    %1528 = vmatpush2.msra.mxu0 0.0
    %1529 = vmatprep.subr.mxu0 0.0
    %1530 = vmatpush2.msra.mxu0 0.0
    %1531 = vmatprep.subr.mxu0 0.0
    %1532 = vmatpush2.msra.mxu0 0.0
    %1533 = vmatprep.subr.mxu0 0.0
    %1534 = vmatpush2.msra.mxu0 0.0
    %1535 = vmatprep.subr.mxu0 0.0
    %1536 = vmatpush2.msra.mxu0 0.0
    %1537 = vmatprep.subr.mxu0 0.0
    %1538 = vmatpush2.msra.mxu0 0.0
    %1539 = vmatprep.subr.mxu0 0.0
    %1540 = vmatpush2.msra.mxu0 0.0
    %1541 = vmatprep.subr.mxu0 0.0
    %1542 = vmatpush2.msra.mxu0 0.0
    %1543 = vmatprep.subr.mxu0 0.0
    %1544 = vmatpush2.msra.mxu0 0.0
    %1545 = vmatprep.subr.mxu0 0.0
    %1546 = vmatpush2.msra.mxu0 0.0
    %1547 = vmatprep.subr.mxu0 0.0
    %1548 = vmatpush2.msra.mxu0 0.0
    %1549 = vmatprep.subr.mxu0 0.0
    %1550 = vmatpush2.msra.mxu0 0.0
    %1551 = vmatprep.subr.mxu0 0.0
    %1552 = vmatpush2.msra.mxu0 0.0
    %1553 = vmatprep.subr.mxu0 0.0
    %1554 = vmatpush2.msra.mxu0 0.0
    %1555 = vmatprep.subr.mxu0 0.0
    %1556 = vmatpush2.msra.mxu0 0.0
    %1557 = vmatprep.mubr.f32.mxu0 0.0
    %1558 = vmatmul.mubr.f32.gmra.mxu0 %v1421
    %v1559 = vpop.f32.mrf.mxu0
    %v1560 = vadd.f32 0.0, %v1559
    %v1561 = vpop.f32.mrf.mxu0
    %v1562 = vadd.f32 0.0, %v1561
    %1563 = vdwg.mxu0
    %v1564 = vadd.f32 %v215, %v1489
    %v1565 = vadd.f32 %v217, %v1491
    %v1566 = vadd.f32 %v328, %v1560
    %v1567 = vadd.f32 %v330, %v1562
    %v1568 = vxor.u32 %v1564, 2147483648
    %v1569 = vmul.f32 %v1568, 1.442695
    %v1570 = vpow.pop %v1569
    %v1571 = vadd.f32 %v1570, 1.0
    %v1572 = vrcp.pop %v1571
    %v1573 = vmul.f32 1.0, %v1572
    %v1574 = vxor.u32 %v1565, 2147483648
    %v1575 = vmul.f32 %v1574, 1.442695
    %v1576 = vpow.pop %v1575
    %v1577 = vadd.f32 %v1576, 1.0
    %v1578 = vrcp.pop %v1577
    %v1579 = vmul.f32 1.0, %v1578
    %v1580 = vtanh.pop %v1566
    %v1581 = vxor.u32 %v1567, 2147483648
    %v1582 = vmul.f32 %v1581, 1.442695
    %v1583 = vpow.pop %v1582
    %v1584 = vadd.f32 %v1583, 1.0
    %v1585 = vrcp.pop %v1584
    %v1586 = vmul.f32 1.0, %v1585
    %v1587 = vmul.f32 %v1579, %v1419
    %v1588 = vmul.f32 %v1573, %v1580
    %v1589 = vadd.f32 %v1587, %v1588
    %v1590 = vtanh.pop %v1589
    %v1591 = vmul.f32 %v1586, %v1590
    %1592 = vmatprep.subr.mxu0 %v399
    %1593 = vmatpush1.msra.mxu0 %v398
    %1594 = vmatprep.subr.mxu0 %v395
    %1595 = vmatpush1.msra.mxu0 %v394
    %1596 = vmatprep.subr.mxu0 %v391
    %1597 = vmatpush1.msra.mxu0 %v390
    %1598 = vmatprep.subr.mxu0 %v387
    %1599 = vmatpush1.msra.mxu0 %v386
    %1600 = vmatprep.subr.mxu0 %v383
    %1601 = vmatpush1.msra.mxu0 %v382
    %1602 = vmatprep.subr.mxu0 %v379
    %1603 = vmatpush1.msra.mxu0 %v378
    %1604 = vmatprep.subr.mxu0 %v375
    %1605 = vmatpush1.msra.mxu0 %v374
    %1606 = vmatprep.subr.mxu0 %v371
    %1607 = vmatpush1.msra.mxu0 %v370
    %1608 = vmatprep.subr.mxu0 %v367
    %1609 = vmatpush1.msra.mxu0 %v366
    %1610 = vmatprep.subr.mxu0 %v363
    %1611 = vmatpush1.msra.mxu0 %v362
    %1612 = vmatprep.subr.mxu0 %v359
    %1613 = vmatpush1.msra.mxu0 %v358
    %1614 = vmatprep.subr.mxu0 %v355
    %1615 = vmatpush1.msra.mxu0 %v354
    %1616 = vmatprep.subr.mxu0 %v351
    %1617 = vmatpush1.msra.mxu0 %v350
    %1618 = vmatprep.subr.mxu0 %v347
    %1619 = vmatpush1.msra.mxu0 %v346
    %1620 = vmatprep.subr.mxu0 %v343
    %1621 = vmatpush1.msra.mxu0 %v342
    %1622 = vmatprep.subr.mxu0 %v339
    %1623 = vmatpush1.msra.mxu0 %v338
    %1624 = vmatprep.subr.mxu0 0.0
    %1625 = vmatpush2.msra.mxu0 0.0
    %1626 = vmatprep.subr.mxu0 0.0
    %1627 = vmatpush2.msra.mxu0 0.0
    %1628 = vmatprep.subr.mxu0 0.0
    %1629 = vmatpush2.msra.mxu0 0.0
    %1630 = vmatprep.subr.mxu0 0.0
    %1631 = vmatpush2.msra.mxu0 0.0
    %1632 = vmatprep.subr.mxu0 0.0
    %1633 = vmatpush2.msra.mxu0 0.0
    %1634 = vmatprep.subr.mxu0 0.0
    %1635 = vmatpush2.msra.mxu0 0.0
    %1636 = vmatprep.subr.mxu0 0.0
    %1637 = vmatpush2.msra.mxu0 0.0
    %1638 = vmatprep.subr.mxu0 0.0
    %1639 = vmatpush2.msra.mxu0 0.0
    %1640 = vmatprep.subr.mxu0 0.0
    %1641 = vmatpush2.msra.mxu0 0.0
    %1642 = vmatprep.subr.mxu0 0.0
    %1643 = vmatpush2.msra.mxu0 0.0
    %1644 = vmatprep.subr.mxu0 0.0
    %1645 = vmatpush2.msra.mxu0 0.0
    %1646 = vmatprep.subr.mxu0 0.0
    %1647 = vmatpush2.msra.mxu0 0.0
    %1648 = vmatprep.subr.mxu0 0.0
    %1649 = vmatpush2.msra.mxu0 0.0
    %1650 = vmatprep.subr.mxu0 0.0
    %1651 = vmatpush2.msra.mxu0 0.0
    %1652 = vmatprep.subr.mxu0 0.0
    %1653 = vmatpush2.msra.mxu0 0.0
    %1654 = vmatprep.subr.mxu0 0.0
    %1655 = vmatpush2.msra.mxu0 0.0
    %1656 = vmatprep.mubr.f32.mxu0 0.0
    %1657 = vmatmul.mubr.f32.gmra.mxu0 %v1591
    %v1658 = vpop.f32.mrf.mxu0
    %v1659 = vadd.f32 0.0, %v1658
    %v1660 = vpop.f32.mrf.mxu0
    %v1661 = vadd.f32 0.0, %v1660
    %1662 = vdwg.mxu0
    %1663 = vmatprep.subr.mxu0 %v401
    %1664 = vmatpush1.msra.mxu0 %v400
    %1665 = vmatprep.subr.mxu0 %v397
    %1666 = vmatpush1.msra.mxu0 %v396
    %1667 = vmatprep.subr.mxu0 %v393
    %1668 = vmatpush1.msra.mxu0 %v392
    %1669 = vmatprep.subr.mxu0 %v389
    %1670 = vmatpush1.msra.mxu0 %v388
    %1671 = vmatprep.subr.mxu0 %v385
    %1672 = vmatpush1.msra.mxu0 %v384
    %1673 = vmatprep.subr.mxu0 %v381
    %1674 = vmatpush1.msra.mxu0 %v380
    %1675 = vmatprep.subr.mxu0 %v377
    %1676 = vmatpush1.msra.mxu0 %v376
    %1677 = vmatprep.subr.mxu0 %v373
    %1678 = vmatpush1.msra.mxu0 %v372
    %1679 = vmatprep.subr.mxu0 %v369
    %1680 = vmatpush1.msra.mxu0 %v368
    %1681 = vmatprep.subr.mxu0 %v365
    %1682 = vmatpush1.msra.mxu0 %v364
    %1683 = vmatprep.subr.mxu0 %v361
    %1684 = vmatpush1.msra.mxu0 %v360
    %1685 = vmatprep.subr.mxu0 %v357
    %1686 = vmatpush1.msra.mxu0 %v356
    %1687 = vmatprep.subr.mxu0 %v353
    %1688 = vmatpush1.msra.mxu0 %v352
    %1689 = vmatprep.subr.mxu0 %v349
    %1690 = vmatpush1.msra.mxu0 %v348
    %1691 = vmatprep.subr.mxu0 %v345
    %1692 = vmatpush1.msra.mxu0 %v344
    %1693 = vmatprep.subr.mxu0 %v341
    %1694 = vmatpush1.msra.mxu0 %v340
    %1695 = vmatprep.subr.mxu0 0.0
    %1696 = vmatpush2.msra.mxu0 0.0
    %1697 = vmatprep.subr.mxu0 0.0
    %1698 = vmatpush2.msra.mxu0 0.0
    %1699 = vmatprep.subr.mxu0 0.0
    %1700 = vmatpush2.msra.mxu0 0.0
    %1701 = vmatprep.subr.mxu0 0.0
    %1702 = vmatpush2.msra.mxu0 0.0
    %1703 = vmatprep.subr.mxu0 0.0
    %1704 = vmatpush2.msra.mxu0 0.0
    %1705 = vmatprep.subr.mxu0 0.0
    %1706 = vmatpush2.msra.mxu0 0.0
    %1707 = vmatprep.subr.mxu0 0.0
    %1708 = vmatpush2.msra.mxu0 0.0
    %1709 = vmatprep.subr.mxu0 0.0
    %1710 = vmatpush2.msra.mxu0 0.0
    %1711 = vmatprep.subr.mxu0 0.0
    %1712 = vmatpush2.msra.mxu0 0.0
    %1713 = vmatprep.subr.mxu0 0.0
    %1714 = vmatpush2.msra.mxu0 0.0
    %1715 = vmatprep.subr.mxu0 0.0
    %1716 = vmatpush2.msra.mxu0 0.0
    %1717 = vmatprep.subr.mxu0 0.0
    %1718 = vmatpush2.msra.mxu0 0.0
    %1719 = vmatprep.subr.mxu0 0.0
    %1720 = vmatpush2.msra.mxu0 0.0
    %1721 = vmatprep.subr.mxu0 0.0
    %1722 = vmatpush2.msra.mxu0 0.0
    %1723 = vmatprep.subr.mxu0 0.0
    %1724 = vmatpush2.msra.mxu0 0.0
    %1725 = vmatprep.subr.mxu0 0.0
    %1726 = vmatpush2.msra.mxu0 0.0
    %1727 = vmatprep.mubr.f32.mxu0 0.0
    %1728 = vmatmul.mubr.f32.gmra.mxu0 %v1591
    %v1729 = vpop.f32.mrf.mxu0
    %v1730 = vadd.f32 0.0, %v1729
    %v1731 = vpop.f32.mrf.mxu0
    %v1732 = vadd.f32 0.0, %v1731
    %1733 = vdwg.mxu0
    %v1734 = vadd.f32 %v221, %v1659
    %v1735 = vadd.f32 %v223, %v1661
    %v1736 = vadd.f32 %v334, %v1730
    %v1737 = vadd.f32 %v336, %v1732
    %v1738 = vxor.u32 %v1734, 2147483648
    %v1739 = vmul.f32 %v1738, 1.442695
    %v1740 = vpow.pop %v1739
    %v1741 = vadd.f32 %v1740, 1.0
    %v1742 = vrcp.pop %v1741
    %v1743 = vmul.f32 1.0, %v1742
    %v1744 = vxor.u32 %v1735, 2147483648
    %v1745 = vmul.f32 %v1744, 1.442695
    %v1746 = vpow.pop %v1745
    %v1747 = vadd.f32 %v1746, 1.0
    %v1748 = vrcp.pop %v1747
    %v1749 = vmul.f32 1.0, %v1748
    %v1750 = vtanh.pop %v1736
    %v1751 = vxor.u32 %v1737, 2147483648
    %v1752 = vmul.f32 %v1751, 1.442695
    %v1753 = vpow.pop %v1752
    %v1754 = vadd.f32 %v1753, 1.0
    %v1755 = vrcp.pop %v1754
    %v1756 = vmul.f32 1.0, %v1755
    %v1757 = vmul.f32 %v1749, %v1589
    %v1758 = vmul.f32 %v1743, %v1750
    %v1759 = vadd.f32 %v1757, %v1758
    %v1760 = vtanh.pop %v1759
    %v1761 = vmul.f32 %v1756, %v1760
    %v1762 = vld [vmem:[%s4] sm:$0xff]
    %v1763 = vld [vmem:[%s4 + $0x8] sm:$0xff]
    %v1764 = vld [vmem:[%s4 + $0x10] sm:$0xff]
    %v1765 = vld [vmem:[%s4 + $0x18] sm:$0xff]
    %v1766 = vld [vmem:[%s4 + $0x20] sm:$0xff]
    %v1767 = vld [vmem:[%s4 + $0x28] sm:$0xff]
    %v1768 = vld [vmem:[%s4 + $0x30] sm:$0xff]
    %v1769 = vld [vmem:[%s4 + $0x38] sm:$0xff]
    %v1770 = vld [vmem:[%s4 + $0x40] sm:$0xff]
    %v1771 = vld [vmem:[%s4 + $0x48] sm:$0xff]
    %v1772 = vld [vmem:[%s4 + $0x50] sm:$0xff]
    %v1773 = vld [vmem:[%s4 + $0x58] sm:$0xff]
    %v1774 = vld [vmem:[%s4 + $0x60] sm:$0xff]
    %v1775 = vld [vmem:[%s4 + $0x68] sm:$0xff]
    %v1776 = vld [vmem:[%s4 + $0x70] sm:$0xff]
    %v1777 = vld [vmem:[%s4 + $0x78] sm:$0xff]
    %v1778 = vld [vmem:[%s5] sm:$0x1]
    %v1780 = vlaneseq
    %v1781 = vshrl.u32 %v1780, 7
    %v1782 = vsub.s32 0, %v1781
    %v1783 = vrot.slane %v1778, %v1782
    %1785 = vmatprep.subr.mxu0 0.0
    %1786 = vmatpush1.msra.mxu0 %v1777
    %1787 = vmatprep.subr.mxu0 0.0
    %1788 = vmatpush1.msra.mxu0 %v1776
    %1789 = vmatprep.subr.mxu0 0.0
    %1790 = vmatpush1.msra.mxu0 %v1775
    %1791 = vmatprep.subr.mxu0 0.0
    %1792 = vmatpush1.msra.mxu0 %v1774
    %1793 = vmatprep.subr.mxu0 0.0
    %1794 = vmatpush1.msra.mxu0 %v1773
    %1795 = vmatprep.subr.mxu0 0.0
    %1796 = vmatpush1.msra.mxu0 %v1772
    %1797 = vmatprep.subr.mxu0 0.0
    %1798 = vmatpush1.msra.mxu0 %v1771
    %1799 = vmatprep.subr.mxu0 0.0
    %1800 = vmatpush1.msra.mxu0 %v1770
    %1801 = vmatprep.subr.mxu0 0.0
    %1802 = vmatpush1.msra.mxu0 %v1769
    %1803 = vmatprep.subr.mxu0 0.0
    %1804 = vmatpush1.msra.mxu0 %v1768
    %1805 = vmatprep.subr.mxu0 0.0
    %1806 = vmatpush1.msra.mxu0 %v1767
    %1807 = vmatprep.subr.mxu0 0.0
    %1808 = vmatpush1.msra.mxu0 %v1766
    %1809 = vmatprep.subr.mxu0 0.0
    %1810 = vmatpush1.msra.mxu0 %v1765
    %1811 = vmatprep.subr.mxu0 0.0
    %1812 = vmatpush1.msra.mxu0 %v1764
    %1813 = vmatprep.subr.mxu0 0.0
    %1814 = vmatpush1.msra.mxu0 %v1763
    %1815 = vmatprep.subr.mxu0 0.0
    %1816 = vmatpush1.msra.mxu0 %v1762
    %1817 = vmatprep.subr.mxu0 0.0
    %1818 = vmatpush2.msra.mxu0 0.0
    %1819 = vmatprep.subr.mxu0 0.0
    %1820 = vmatpush2.msra.mxu0 0.0
    %1821 = vmatprep.subr.mxu0 0.0
    %1822 = vmatpush2.msra.mxu0 0.0
    %1823 = vmatprep.subr.mxu0 0.0
    %1824 = vmatpush2.msra.mxu0 0.0
    %1825 = vmatprep.subr.mxu0 0.0
    %1826 = vmatpush2.msra.mxu0 0.0
    %1827 = vmatprep.subr.mxu0 0.0
    %1828 = vmatpush2.msra.mxu0 0.0
    %1829 = vmatprep.subr.mxu0 0.0
    %1830 = vmatpush2.msra.mxu0 0.0
    %1831 = vmatprep.subr.mxu0 0.0
    %1832 = vmatpush2.msra.mxu0 0.0
    %1833 = vmatprep.subr.mxu0 0.0
    %1834 = vmatpush2.msra.mxu0 0.0
    %1835 = vmatprep.subr.mxu0 0.0
    %1836 = vmatpush2.msra.mxu0 0.0
    %1837 = vmatprep.subr.mxu0 0.0
    %1838 = vmatpush2.msra.mxu0 0.0
    %1839 = vmatprep.subr.mxu0 0.0
    %1840 = vmatpush2.msra.mxu0 0.0
    %1841 = vmatprep.subr.mxu0 0.0
    %1842 = vmatpush2.msra.mxu0 0.0
    %1843 = vmatprep.subr.mxu0 0.0
    %1844 = vmatpush2.msra.mxu0 0.0
    %1845 = vmatprep.subr.mxu0 0.0
    %1846 = vmatpush2.msra.mxu0 0.0
    %1847 = vmatprep.subr.mxu0 0.0
    %1848 = vmatpush2.msra.mxu0 0.0
    %1849 = vmatprep.mubr.f32.mxu0 0.0
    %1850 = vmatmul.mubr.f32.gmra.mxu0 %v1761
    %v1851 = vpop.f32.mrf.mxu0
    %v1852 = vadd.f32 %v1783, %v1851
    %v1853 = vpop.f32.mrf.mxu0
    %1854 = vdwg.mxu0
    %v1855 = vld [vmem:[%s6] sm:$0xff]
    %v1856 = vlaneseq
    %v1857 = vand.u32 %v1856, 127
    %1858 = vset.pattern.permute.xlu0 0
    %1859 = vperm.xlu0 %1858, %v1855
    %v1860 = vpop.permute.xlu0 %1859
    %vm1861 = vcmp.eq.s32.totalorder %v1857, %v1860
    %v1862 = vsel %vm1861, 1, 0
    %v1863 = vcvt.s32.f32 %v1862
    %vm1864 = vcmask 39936
    %v1865 = vsel %vm1864, %v1863, 0.0
    %1866 = vadd.xlane.f32.xlu0 %v1865
    %v1867 = vpop.xlane.xlu0 %1866
    %v1868 = vsel %vm1864, %v1852, -inf
    %1869 = vmax.xlane.f32.xlu0 %v1868
    %v1870 = vpop.xlane.xlu0 %1869
    %v1871 = vsub.f32 %v1852, %v1870
    %v1872 = vmul.f32 %v1871, 1.442695
    %v1873 = vpow.pop %v1872
    %v1874 = vsel %vm1864, %v1873, 0.0
    %1875 = vadd.xlane.f32.xlu0 %v1874
    %v1876 = vpop.xlane.xlu0 %1875
    %v1877 = vlog2.pop %v1876
    %v1878 = vmul.f32 %v1877, 0.6931472
    %v1879 = vadd.f32 %v1870, %v1878
    %v1880 = vmul.f32 %v1852, %v1863
    %v1881 = vsel %vm1864, %v1880, 0.0
    %1882 = vadd.xlane.f32.xlu0 %v1881
    %v1883 = vpop.xlane.xlu0 %1882
    %v1884 = vmul.f32 %v1867, %v1879
    %v1885 = vsub.f32 %v1884, %v1883
    %vm1886 = vcmask 7168
    %v1887 = vsel %vm1886, %v1885, 0.0
    %1888 = vadd.xlane.f32.xlu0 %v1887
    %v1889 = vpop.xlane.xlu0 %1888
    %v1890 = vrot.slane %v1889, 4
    %v1891 = vadd.f32 %v1889, %v1890
    %v1892 = vrot.slane %v1891, 2
    %v1893 = vadd.f32 %v1891, %v1892
    %v1894 = vrot.slane %v1893, 1
    %v1895 = vadd.f32 %v1893, %v1894
    %s1896 = vtos %v1895
    %v1897 = vrcp.pop 3.0
    %s1898 = vtos %v1897
    %s1899 = smul.f32 %s1896, %s1898
    %s1900 = scalar_lea.smem [#allocation5], 0
    %1901 = sst [smem:[%s1900]] %s1899
    // Predicated region
    $region34: #{model_loss.1} parent=1 // pred_check
      _
    $region35: #{model_loss.1} parent=1 // pred_check_branch
      %1903 = sbr.rel (0) target = $region37
    $region36: #{model_loss.1} parent=1 // pred_region
      %s1905 = ssub.s32 16, 16
      %1906 = vsyncadd [#allocation4], %s1905
      %1909 = dma.smem_to_hbm [#allocation5], 16, %s7, [#allocation4]
    $region37: #{model_loss.1} parent=1 // pred_fallthru
      _
    // Predicated region
    $region38: #{model_loss.1} parent=1 // pred_check
      _
    $region39: #{model_loss.1} parent=1 // pred_check_branch
      %1911 = sbr.rel (0) target = $region41
    $region40: #{model_loss.1} parent=1 // pred_region
      %1912 = dma.done [#allocation4], 16
    $region41: #{model_loss.1} parent=1 // pred_fallthru
      _
    %1913 = sfence
    %1914 = vsyncpa [#allocation3], 1
    %1915 = vsyncpa [#allocation4], 1

</llo_original>
